<compile_context>
chip_gen: v6e
topology: v6e:2x2x1
jax: 0.10.0
libtpu: 0.0.40
codegen_flags: <defaults>
</compile_context>

<pallas_src>
import functools

import jax
import jax.numpy as jnp
from jax import lax
from jax.experimental import pallas as pl
from jax.experimental.pallas import tpu as pltpu

FD = 27      # packed floats per face: a1,b1,c1,a2,b2,c2, z0,dz1,dz2, p0,dp1,dp2, n0,dn1,dn2
LANES = 128
MAX_TR = 512  # max flat rows per tile (sweepable; VMEM is not the limiter on any gen)

# PyTorch3D defaults: PointLights(ambient=0.5, diffuse=0.3, specular=0.2),
# Materials(shininess=64), light located at (0, 0, 3), white vertex textures.
AMBIENT = 0.5
DIFFUSE = 0.3
SPECULAR = 0.2
SHININESS = 64
LIGHT_LOC = (0.0, 0.0, 3.0)


def _raster_kernel(facedata_ref, facelist_ref, npairs_ref, cam_ref, shade_ref,
                   zbuf, wpx, wpy, wpz, wnx, wny, wnz, *, F1, Lw, TR, W):
    """Rasterize + deferred-Phong-shade one (batch, row-tile) block.

    facedata_ref: SMEM (B*F1*FD,) f32 -- per-face packed scalars (delta form), dummy face at F1-1
    facelist_ref: SMEM (B*n_rt*Lw,) i32 -- per-tile compacted face indices (pad = dummy)
    npairs_ref:   SMEM (B*n_rt,)   i32 -- per-tile face-pair counts (branch-free loop bound)
    cam_ref:      SMEM (B*6,)      f32 -- camera center (3) + light location (3)
    shade_ref:    VMEM (1, TR, 128) f32 -- output (shade*255, masked where not hit)
    zbuf/w*:      VMEM (TR, 128) f32 scratch -- z-buffer + winning attributes
    """
    b = pl.program_id(0)
    rt = pl.program_id(1)
    n_rt = pl.num_programs(1)

    # ---- in-kernel pixel coordinates (no HBM streams) --------------------------------
    row_ids = lax.broadcasted_iota(jnp.int32, (TR, LANES), 0)
    lane_ids = lax.broadcasted_iota(jnp.int32, (TR, LANES), 1)
    flat = (rt * TR + row_ids) * LANES + lane_ids
    flat_f = flat.astype(jnp.float32)          # exact for images < 2**24 pixels
    Wf = float(W)
    ys = jnp.floor(flat_f / Wf)
    xs = flat_f - ys * Wf
    # fix the possible 1-ulp rounding of the float division
    too_hi = xs >= Wf
    ys = jnp.where(too_hi, ys + 1.0, ys)
    xs = jnp.where(too_hi, xs - Wf, xs)
    too_lo = xs < 0.0
    ys = jnp.where(too_lo, ys - 1.0, ys)
    xs = jnp.where(too_lo, xs + Wf, xs)

    BIG = 1e10
    zbuf[...] = jnp.full(zbuf.shape, BIG, jnp.float32)
    # NOTE: attribute planes are intentionally left uninitialised; the final image is
    # gated on `hit` (zbuf), so stale scratch never reaches the output.

    fd_b = b * (F1 * FD)
    lst_b = (b * n_rt + rt) * Lw
    npr = npairs_ref[b * n_rt + rt]

    def raster_one(fidx):
        base = fd_b + fidx * FD
        a1 = facedata_ref[base + 0]
        b1 = facedata_ref[base + 1]
        c1 = facedata_ref[base + 2]
        a2 = facedata_ref[base + 3]
        b2 = facedata_ref[base + 4]
        c2 = facedata_ref[base + 5]
        z0 = facedata_ref[base + 6]
        dz1 = facedata_ref[base + 7]
        dz2 = facedata_ref[base + 8]

        # affine barycentrics at pixel centres (coefficients precomputed, delta form).
        # TODO(synk): PyTorch3D uses perspective-correct barycentrics for PerspectiveCameras.
        l1 = a1 * xs + b1 * ys + c1
        l2 = a2 * xs + b2 * ys + c2
        l0 = 1.0 - l1 - l2
        z = z0 + l1 * dz1 + l2 * dz2
        zb = zbuf[...]
        inside = jnp.minimum(l0, jnp.minimum(l1, l2)) >= 0.0
        closer = inside & (z > 1e-5) & (z < zb)

        # interpolate world position / vertex normal (delta form; shading deferred)
        px = facedata_ref[base + 9] + l1 * facedata_ref[base + 12] + l2 * facedata_ref[base + 15]
        py = facedata_ref[base + 10] + l1 * facedata_ref[base + 13] + l2 * facedata_ref[base + 16]
        pz = facedata_ref[base + 11] + l1 * facedata_ref[base + 14] + l2 * facedata_ref[base + 17]
        nx = facedata_ref[base + 18] + l1 * facedata_ref[base + 21] + l2 * facedata_ref[base + 24]
        ny = facedata_ref[base + 19] + l1 * facedata_ref[base + 22] + l2 * facedata_ref[base + 25]
        nz = facedata_ref[base + 20] + l1 * facedata_ref[base + 23] + l2 * facedata_ref[base + 26]

        zbuf[...] = jnp.where(closer, z, zb)
        wpx[...] = jnp.where(closer, px, wpx[...])
        wpy[...] = jnp.where(closer, py, wpy[...])
        wpz[...] = jnp.where(closer, pz, wpz[...])
        wnx[...] = jnp.where(closer, nx, wnx[...])
        wny[...] = jnp.where(closer, ny, wny[...])
        wnz[...] = jnp.where(closer, nz, wnz[...])

    def pair_body(i, carry):
        # branch-free: list holds only faces whose bbox overlaps this tile; odd counts
        # are padded with a dummy face whose z-test always fails (idempotent, no branch).
        raster_one(facelist_ref[lst_b + 2 * i])
        raster_one(facelist_ref[lst_b + 2 * i + 1])
        return carry

    lax.fori_loop(0, npr, pair_body, 0)

    # ---- deferred Phong shading: runs once per tile, not once per face --------------
    zb = zbuf[...]
    hit = zb < 1e9

    nx, ny, nz = wnx[...], wny[...], wnz[...]
    px, py, pz = wpx[...], wpy[...], wpz[...]
    n_inv = lax.rsqrt(nx * nx + ny * ny + nz * nz + 1e-12)
    nx, ny, nz = nx * n_inv, ny * n_inv, nz * n_inv

    cx = cam_ref[b * 6 + 0]
    cy = cam_ref[b * 6 + 1]
    cz = cam_ref[b * 6 + 2]
    lx = cam_ref[b * 6 + 3]
    ly = cam_ref[b * 6 + 4]
    lz = cam_ref[b * 6 + 5]

    ldx, ldy, ldz = lx - px, ly - py, lz - pz
    l_inv = lax.rsqrt(ldx * ldx + ldy * ldy + ldz * ldz + 1e-12)
    ldx, ldy, ldz = ldx * l_inv, ldy * l_inv, ldz * l_inv

    vx, vy, vz = cx - px, cy - py, cz - pz
    v_inv = lax.rsqrt(vx * vx + vy * vy + vz * vz + 1e-12)
    vx, vy, vz = vx * v_inv, vy * v_inv, vz * v_inv

    # Phong: ambient + diffuse*relu(N.L) + specular*relu(R.V)^shininess; like
    # PyTorch3D's specular(), the highlight is NOT gated on N.L > 0.
    ndl = nx * ldx + ny * ldy + nz * ldz
    rx = 2.0 * ndl * nx - ldx
    ry = 2.0 * ndl * ny - ldy
    rz = 2.0 * ndl * nz - ldz
    rdv = jnp.maximum(rx * vx + ry * vy + rz * vz, 0.0)
    spec = rdv ** SHININESS
    shade = AMBIENT + DIFFUSE * jnp.maximum(ndl, 0.0) + SPECULAR * spec

    # faces_per_pixel=1 & blur_radius=0 -> hard blend.
    # TODO(synk): SoftPhongShader's softmax_rgb_blend (sigma/gamma 1e-4) is
    # approximated by hard blending here.
    # torch post-proc: images[alpha < 0.5] = 0 ; images * 255  (alpha derived in wrapper)
    shade_ref[0, :, :] = jnp.where(hit, shade * 255.0, 0.0)


def _build_face_tables(vertices, faces, transform_matrix, focal_length,
                       principal_point, image_size, n_rt, tr, W, H, npix):
    """Camera transform + projection + vertex normals; packed per face (delta form)
    plus per-(batch, row-tile) compacted face-index lists for the branch-free loop."""
    B, V, _ = vertices.shape
    F = faces.shape[0]
    Rm = transform_matrix[:, :3, :3]
    T = transform_matrix[:, :3, 3]

    # PyTorch3D row-vector convention: X_cam = X_world @ R + T
    verts_cam = jnp.einsum("bvi,bij->bvj", vertices, Rm) + T[:, None, :]
    zc = verts_cam[..., 2]
    fx = focal_length[:, 0][:, None]
    fy = focal_length[:, -1][:, None]
    ppx = principal_point[:, 0][:, None]
    ppy = principal_point[:, 1][:, None]
    x_ndc = fx * verts_cam[..., 0] / zc + ppx
    y_ndc = fy * verts_cam[..., 1] / zc + ppy
    # PyTorch3D NDC (+x left, +y up) -> pixel coords, pixel centres at integers.
    # TODO(synk): exact PyTorch3D pixel-centre convention is ndc = 1 - (2i+1)/S.
    x_pix = (1.0 - x_ndc) * 0.5 * (image_size - 1.0)
    y_pix = (1.0 - y_ndc) * 0.5 * (image_size - 1.0)

    # area-weighted vertex normals (Meshes.verts_normals equivalent)
    v0w = vertices[:, faces[:, 0]]
    v1w = vertices[:, faces[:, 1]]
    v2w = vertices[:, faces[:, 2]]
    fn = jnp.cross(v1w - v0w, v2w - v0w)
    vn = jnp.zeros_like(vertices)
    vn = vn.at[:, faces[:, 0]].add(fn)
    vn = vn.at[:, faces[:, 1]].add(fn)
    vn = vn.at[:, faces[:, 2]].add(fn)
    vn = vn / (jnp.linalg.norm(vn, axis=-1, keepdims=True) + 1e-12)
    n0 = vn[:, faces[:, 0]]
    n1 = vn[:, faces[:, 1]]
    n2 = vn[:, faces[:, 2]]

    x0, x1, x2 = (x_pix[:, faces[:, k]] for k in range(3))
    y0, y1, y2 = (y_pix[:, faces[:, k]] for k in range(3))
    z0, z1, z2 = (zc[:, faces[:, k]] for k in range(3))

    # precomputed edge-function coefficients: l1 = a1*x + b1*y + c1, l2 = a2*x + b2*y + c2
    det = (y1 - y2) * (x0 - x2) + (x2 - x1) * (y0 - y2)
    validf = jnp.abs(det) > 1e-9
    inv_det = jnp.where(validf, 1.0 / jnp.where(validf, det, 1.0), 0.0)
    a1 = (y2 - y0) * inv_det
    b1 = (x0 - x2) * inv_det
    c1 = -(a1 * x2 + b1 * y2)
    a2 = (y0 - y1) * inv_det
    b2 = (x1 - x0) * inv_det
    c2 = -(a2 * x0 + b2 * y0)

    coeff = jnp.stack([a1, b1, c1, a2, b2, c2, z0, z1 - z0, z2 - z0], axis=-1)  # (B,F,9)
    fpack = jnp.concatenate(
        [coeff, v0w, v1w - v0w, v2w - v0w, n0, n1 - n0, n2 - n0], axis=-1)      # (B,F,27)
    # dummy face at index F: all zeros -> l1=l2=0, l0=1, z=0 fails the z>1e-5 test
    fpack = jnp.concatenate([fpack, jnp.zeros((B, 1, FD), fpack.dtype)], axis=1)
    facedata = fpack.reshape(B * (F + 1) * FD).astype(jnp.float32)

    # ---- per-(batch, row-tile) binning: compacted face-index lists + pair counts ----
    xmn = jnp.minimum(jnp.minimum(x0, x1), x2)
    xmx = jnp.maximum(jnp.maximum(x0, x1), x2)
    ymn = jnp.minimum(jnp.minimum(y0, y1), y2)
    ymx = jnp.maximum(jnp.maximum(y0, y1), y2)
    zmx = jnp.maximum(jnp.maximum(z0, z1), z2)

    y_lo, y_hi = [], []
    for r in range(n_rt):
        s = min(r * tr * LANES, npix - 1)
        e = min((r + 1) * tr * LANES, npix) - 1
        y_lo.append(float(s // W))
        y_hi.append(float(e // W))
    y_lo = jnp.asarray(y_lo, jnp.float32)[None, :, None]
    y_hi = jnp.asarray(y_hi, jnp.float32)[None, :, None]

    # NaN bboxes (verts behind camera plane etc.) compare False -> culled.
    hit = (validf[:, None, :] & (zmx[:, None, :] > 1e-5)
           & (xmx[:, None, :] >= 0.0) & (xmn[:, None, :] <= float(W - 1))
           & (ymx[:, None, :] >= y_lo) & (ymn[:, None, :] <= y_hi))      # (B, n_rt, F)

    count = jnp.sum(hit, axis=-1).astype(jnp.int32)                      # (B, n_rt)
    order = jnp.argsort(jnp.where(hit, 0, 1), axis=-1, stable=True).astype(jnp.int32)
    Lw = F + (F % 2)                                                     # even list width
    if Lw > F:
        order = jnp.concatenate(
            [order, jnp.full((B, n_rt, Lw - F), F, jnp.int32)], axis=-1)
    facelist = jnp.where(jnp.arange(Lw)[None, None, :] < count[:, :, None], order, F)
    npairs = (count + 1) // 2
    return facedata, facelist.reshape(-1), npairs.reshape(-1), Lw


def render_mesh(vertices, faces, transform_matrix, focal_length, image_size,
                principal_point=None, tile_rows=MAX_TR):
    """JAX/Pallas equivalent of RenderMesh.forward(vertices, transform_matrix=..., focal_length=...).

    Returns (images * 255 with alpha<0.5 pixels zeroed, alpha) as
    (B, 3, H, W) and (B, 1, H, W) float32.
    """
    B = vertices.shape[0]
    H = W = int(image_size)
    F = faces.shape[0]
    if principal_point is None:
        principal_point = jnp.zeros((B, 2), jnp.float32)

    # ---- lane-dense flattened pixel layout: (rows, 128) --------------------------
    npix = H * W
    rows = (npix + LANES - 1) // LANES
    rows8 = ((rows + 7) // 8) * 8
    tr = min(rows8, tile_rows)
    # expose >= 2 parallel grid blocks for v7x's two TensorCores when batch == 1
    if B == 1 and rows8 > 8:
        tr = min(tr, ((rows8 // 2 + 7) // 8) * 8)
    rows_pad = ((rows8 + tr - 1) // tr) * tr
    n_rt = rows_pad // tr

    facedata, facelist, npairs, Lw = _build_face_tables(
        vertices, faces, transform_matrix, focal_length, principal_point,
        float(image_size), n_rt, tr, W, H, npix)

    Rm = transform_matrix[:, :3, :3]
    T = transform_matrix[:, :3, 3]
    cam_center = -jnp.einsum("bi,bji->bj", T, Rm)   # camera center in world coords
    light = jnp.broadcast_to(jnp.asarray(LIGHT_LOC, jnp.float32), (B, 3))
    cam = jnp.concatenate([cam_center, light], axis=-1).reshape(-1).astype(jnp.float32)

    kernel = functools.partial(_raster_kernel, F1=F + 1, Lw=Lw, TR=tr, W=W)
    shade = pl.pallas_call(
        kernel,
        out_shape=jax.ShapeDtypeStruct((B, rows_pad, LANES), jnp.float32),
        grid=(B, n_rt),
        in_specs=[
            pl.BlockSpec(memory_space=pltpu.MemorySpace.SMEM),   # facedata (f32)
            pl.BlockSpec(memory_space=pltpu.MemorySpace.SMEM),   # facelist (i32)
            pl.BlockSpec(memory_space=pltpu.MemorySpace.SMEM),   # npairs   (i32)
            pl.BlockSpec(memory_space=pltpu.MemorySpace.SMEM),   # cam      (f32)
        ],
        out_specs=pl.BlockSpec((1, tr, LANES), lambda b, r: (b, r, 0)),
        scratch_shapes=[pltpu.VMEM((tr, LANES), jnp.float32)] * 7,
        compiler_params=pltpu.CompilerParams(
            dimension_semantics=("parallel", "parallel")),
    )(facedata, facelist, npairs, cam)

    flat = shade.reshape(B, rows_pad * LANES)[:, :npix].reshape(B, H, W)
    # hit pixels always have shade*255 >= AMBIENT*255 = 127.5, so alpha == (shade > 0)
    alpha = (flat > 0.0).astype(jnp.float32)[:, None]
    images = jnp.broadcast_to(flat[:, None], (B, 3, H, W))
    return images, alpha


if __name__ == "__main__":
    key = jax.random.PRNGKey(0)
    B = 2
    image_size = 32

    # deterministic synthetic mesh: jittered octahedron placed in front of the camera
    base_verts = jnp.array(
        [[1, 0, 0], [-1, 0, 0], [0, 1, 0], [0, -1, 0], [0, 0, 1], [0, 0, -1]],
        jnp.float32) * 0.8
    faces = jnp.array(
        [[0, 2, 4], [2, 1, 4], [1, 3, 4], [3, 0, 4],
         [2, 0, 5], [1, 2, 5], [3, 1, 5], [0, 3, 5]], jnp.int32)
    jitter = 0.05 * jax.random.normal(key, (B, 6, 3), jnp.float32)
    vertices = base_verts[None] + jitter + jnp.array([0.0, 0.0, 2.5], jnp.float32)

    transform_matrix = jnp.broadcast_to(jnp.eye(4, dtype=jnp.float32), (B, 4, 4))
    focal_length = jnp.full((B, 1), 2.0, jnp.float32)

    images, alpha = render_mesh(vertices, faces, transform_matrix, focal_length,
                                image_size)
    jax.block_until_ready((images, alpha))
    assert images.shape == (B, 3, image_size, image_size)
    assert alpha.shape == (B, 1, image_size, image_size)
    print("KERNEL_OK")
</pallas_src>

<mosaic_0001>
module attributes {stable_mosaic.version = 11 : i64} {
  func.func @_raster_kernel(%arg0: i32, %arg1: i32, %arg2: memref<486xf32, #tpu.memory_space<smem>>, %arg3: memref<16xi32, #tpu.memory_space<smem>>, %arg4: memref<2xi32, #tpu.memory_space<smem>>, %arg5: memref<12xf32, #tpu.memory_space<smem>>, %arg6: memref<1x8x128xf32, #tpu.memory_space<vmem>>, %arg7: memref<8x128xf32, #tpu.memory_space<vmem>>, %arg8: memref<8x128xf32, #tpu.memory_space<vmem>>, %arg9: memref<8x128xf32, #tpu.memory_space<vmem>>, %arg10: memref<8x128xf32, #tpu.memory_space<vmem>>, %arg11: memref<8x128xf32, #tpu.memory_space<vmem>>, %arg12: memref<8x128xf32, #tpu.memory_space<vmem>>, %arg13: memref<8x128xf32, #tpu.memory_space<vmem>>) attributes {dimension_semantics = [#tpu.dimension_semantics<parallel>, #tpu.dimension_semantics<parallel>], iteration_bounds = array<i64: 2, 1>, scalar_prefetch = 0 : i64, scratch_operands = 7 : i64, tpu.core_type = #tpu.core_type<tc>, window_params = [{transform_indices = @transform_0, window_bounds = array<i64: 486>}, {transform_indices = @transform_1, window_bounds = array<i64: 16>}, {transform_indices = @transform_2, window_bounds = array<i64: 2>}, {transform_indices = @transform_3, window_bounds = array<i64: 12>}, {transform_indices = @transform_4, window_bounds = array<i64: 1, 8, 128>}]} {
    %0 = tpu.iota {dimensions = array<i32: 0>} : vector<8x128xi32>
    %1 = tpu.iota {dimensions = array<i32: 1>} : vector<8x128xi32>
    %c8_i32 = arith.constant 8 : i32
    %2 = arith.muli %arg1, %c8_i32 : i32
    %3 = vector.broadcast %2 : i32 to vector<8x128xi32>
    %4 = arith.addi %3, %0 : vector<8x128xi32>
    %c128_i32 = arith.constant 128 : i32
    %5 = vector.broadcast %c128_i32 : i32 to vector<8x128xi32>
    %6 = arith.muli %4, %5 : vector<8x128xi32>
    %7 = arith.addi %6, %1 : vector<8x128xi32>
    %8 = arith.sitofp %7 : vector<8x128xi32> to vector<8x128xf32>
    %cst = arith.constant 3.200000e+01 : f32
    %9 = vector.broadcast %cst : f32 to vector<8x128xf32>
    %10 = arith.divf %8, %9 : vector<8x128xf32>
    %11 = math.floor %10 : vector<8x128xf32>
    %cst_0 = arith.constant 3.200000e+01 : f32
    %12 = vector.broadcast %cst_0 : f32 to vector<8x128xf32>
    %13 = arith.mulf %11, %12 : vector<8x128xf32>
    %14 = arith.subf %8, %13 : vector<8x128xf32>
    %cst_1 = arith.constant 3.200000e+01 : f32
    %15 = vector.broadcast %cst_1 : f32 to vector<8x128xf32>
    %16 = arith.cmpf oge, %14, %15 : vector<8x128xf32>
    %cst_2 = arith.constant 1.000000e+00 : f32
    %17 = vector.broadcast %cst_2 : f32 to vector<8x128xf32>
    %18 = arith.addf %11, %17 : vector<8x128xf32>
    %19 = arith.select %16, %18, %11 : vector<8x128xi1>, vector<8x128xf32>
    %cst_3 = arith.constant 3.200000e+01 : f32
    %20 = vector.broadcast %cst_3 : f32 to vector<8x128xf32>
    %21 = arith.subf %14, %20 : vector<8x128xf32>
    %22 = arith.select %16, %21, %14 : vector<8x128xi1>, vector<8x128xf32>
    %cst_4 = arith.constant 0.000000e+00 : f32
    %23 = vector.broadcast %cst_4 : f32 to vector<8x128xf32>
    %24 = arith.cmpf olt, %22, %23 : vector<8x128xf32>
    %cst_5 = arith.constant 1.000000e+00 : f32
    %25 = vector.broadcast %cst_5 : f32 to vector<8x128xf32>
    %26 = arith.subf %19, %25 : vector<8x128xf32>
    %27 = arith.select %24, %26, %19 : vector<8x128xi1>, vector<8x128xf32>
    %cst_6 = arith.constant 3.200000e+01 : f32
    %28 = vector.broadcast %cst_6 : f32 to vector<8x128xf32>
    %29 = arith.addf %22, %28 : vector<8x128xf32>
    %30 = arith.select %24, %29, %22 : vector<8x128xi1>, vector<8x128xf32>
    %cst_7 = arith.constant 1.000000e+10 : f32
    %31 = vector.broadcast %cst_7 : f32 to vector<8x128xf32>
    %c0 = arith.constant 0 : index
    %c0_8 = arith.constant 0 : index
    %32 = vector.load %arg7[%c0, %c0_8] : memref<8x128xf32, #tpu.memory_space<vmem>>, vector<8x128xf32>
    tpu.vector_store %arg7[%c0, %c0_8], %31 {strides = array<i32>} : memref<8x128xf32, #tpu.memory_space<vmem>>, vector<8x128xf32>,
    %c243_i32 = arith.constant 243 : i32
    %33 = arith.muli %arg0, %c243_i32 : i32
    %c1_i32 = arith.constant 1 : i32
    %34 = arith.muli %arg0, %c1_i32 : i32
    %35 = arith.addi %34, %arg1 : i32
    %c8_i32_9 = arith.constant 8 : i32
    %36 = arith.muli %35, %c8_i32_9 : i32
    %c1_i32_10 = arith.constant 1 : i32
    %37 = arith.muli %arg0, %c1_i32_10 : i32
    %38 = arith.addi %37, %arg1 : i32
    %39 = arith.index_cast %38 : i32 to index
    %40 = memref.load %arg4[%39] : memref<2xi32, #tpu.memory_space<smem>>
    %c0_i32 = arith.constant 0 : i32
    %c0_i32_11 = arith.constant 0 : i32
    %41 = arith.subi %40, %c0_i32_11 : i32
    %42 = arith.addi %c0_i32_11, %41 : i32
    %c1_i32_12 = arith.constant 1 : i32
    scf.for %arg14 = %c0_i32_11 to %42 step %c1_i32_12  : i32 {
      %c2_i32_51 = arith.constant 2 : i32
      %167 = arith.muli %c2_i32_51, %arg14 : i32
      %168 = arith.addi %36, %167 : i32
      %169 = arith.index_cast %168 : i32 to index
      %170 = memref.load %arg3[%169] : memref<16xi32, #tpu.memory_space<smem>>
      %c27_i32 = arith.constant 27 : i32
      %171 = arith.muli %170, %c27_i32 : i32
      %172 = arith.addi %33, %171 : i32
      %c0_i32_52 = arith.constant 0 : i32
      %173 = arith.addi %172, %c0_i32_52 : i32
      %174 = arith.index_cast %173 : i32 to index
      %175 = memref.load %arg2[%174] : memref<486xf32, #tpu.memory_space<smem>>
      %c1_i32_53 = arith.constant 1 : i32
      %176 = arith.addi %172, %c1_i32_53 : i32
      %177 = arith.index_cast %176 : i32 to index
      %178 = memref.load %arg2[%177] : memref<486xf32, #tpu.memory_space<smem>>
      %c2_i32_54 = arith.constant 2 : i32
      %179 = arith.addi %172, %c2_i32_54 : i32
      %180 = arith.index_cast %179 : i32 to index
      %181 = memref.load %arg2[%180] : memref<486xf32, #tpu.memory_space<smem>>
      %c3_i32_55 = arith.constant 3 : i32
      %182 = arith.addi %172, %c3_i32_55 : i32
      %183 = arith.index_cast %182 : i32 to index
      %184 = memref.load %arg2[%183] : memref<486xf32, #tpu.memory_space<smem>>
      %c4_i32_56 = arith.constant 4 : i32
      %185 = arith.addi %172, %c4_i32_56 : i32
      %186 = arith.index_cast %185 : i32 to index
      %187 = memref.load %arg2[%186] : memref<486xf32, #tpu.memory_space<smem>>
      %c5_i32_57 = arith.constant 5 : i32
      %188 = arith.addi %172, %c5_i32_57 : i32
      %189 = arith.index_cast %188 : i32 to index
      %190 = memref.load %arg2[%189] : memref<486xf32, #tpu.memory_space<smem>>
      %c6_i32_58 = arith.constant 6 : i32
      %191 = arith.addi %172, %c6_i32_58 : i32
      %192 = arith.index_cast %191 : i32 to index
      %193 = memref.load %arg2[%192] : memref<486xf32, #tpu.memory_space<smem>>
      %c7_i32 = arith.constant 7 : i32
      %194 = arith.addi %172, %c7_i32 : i32
      %195 = arith.index_cast %194 : i32 to index
      %196 = memref.load %arg2[%195] : memref<486xf32, #tpu.memory_space<smem>>
      %c8_i32_59 = arith.constant 8 : i32
      %197 = arith.addi %172, %c8_i32_59 : i32
      %198 = arith.index_cast %197 : i32 to index
      %199 = memref.load %arg2[%198] : memref<486xf32, #tpu.memory_space<smem>>
      %200 = vector.broadcast %175 : f32 to vector<8x128xf32>
      %201 = arith.mulf %200, %30 : vector<8x128xf32>
      %202 = vector.broadcast %178 : f32 to vector<8x128xf32>
      %203 = arith.mulf %202, %27 : vector<8x128xf32>
      %204 = arith.addf %201, %203 : vector<8x128xf32>
      %205 = vector.broadcast %181 : f32 to vector<8x128xf32>
      %206 = arith.addf %204, %205 : vector<8x128xf32>
      %207 = vector.broadcast %184 : f32 to vector<8x128xf32>
      %208 = arith.mulf %207, %30 : vector<8x128xf32>
      %209 = vector.broadcast %187 : f32 to vector<8x128xf32>
      %210 = arith.mulf %209, %27 : vector<8x128xf32>
      %211 = arith.addf %208, %210 : vector<8x128xf32>
      %212 = vector.broadcast %190 : f32 to vector<8x128xf32>
      %213 = arith.addf %211, %212 : vector<8x128xf32>
      %cst_60 = arith.constant 1.000000e+00 : f32
      %214 = vector.broadcast %cst_60 : f32 to vector<8x128xf32>
      %215 = arith.subf %214, %206 : vector<8x128xf32>
      %216 = arith.subf %215, %213 : vector<8x128xf32>
      %217 = vector.broadcast %196 : f32 to vector<8x128xf32>
      %218 = arith.mulf %206, %217 : vector<8x128xf32>
      %219 = vector.broadcast %193 : f32 to vector<8x128xf32>
      %220 = arith.addf %219, %218 : vector<8x128xf32>
      %221 = vector.broadcast %199 : f32 to vector<8x128xf32>
      %222 = arith.mulf %213, %221 : vector<8x128xf32>
      %223 = arith.addf %220, %222 : vector<8x128xf32>
      %c0_61 = arith.constant 0 : index
      %c0_62 = arith.constant 0 : index
      %224 = vector.load %arg7[%c0_61, %c0_62] : memref<8x128xf32, #tpu.memory_space<vmem>>, vector<8x128xf32>
      %225 = arith.minimumf %206, %213 : vector<8x128xf32>
      %226 = arith.minimumf %216, %225 : vector<8x128xf32>
      %cst_63 = arith.constant 0.000000e+00 : f32
      %227 = vector.broadcast %cst_63 : f32 to vector<8x128xf32>
      %228 = arith.cmpf oge, %226, %227 : vector<8x128xf32>
      %cst_64 = arith.constant 9.99999974E-6 : f32
      %229 = vector.broadcast %cst_64 : f32 to vector<8x128xf32>
      %230 = arith.cmpf ogt, %223, %229 : vector<8x128xf32>
      %231 = arith.andi %228, %230 : vector<8x128xi1>
      %232 = arith.cmpf olt, %223, %224 : vector<8x128xf32>
      %233 = arith.andi %231, %232 : vector<8x128xi1>
      %c9_i32 = arith.constant 9 : i32
      %234 = arith.addi %172, %c9_i32 : i32
      %235 = arith.index_cast %234 : i32 to index
      %236 = memref.load %arg2[%235] : memref<486xf32, #tpu.memory_space<smem>>
      %c12_i32 = arith.constant 12 : i32
      %237 = arith.addi %172, %c12_i32 : i32
      %238 = arith.index_cast %237 : i32 to index
      %239 = memref.load %arg2[%238] : memref<486xf32, #tpu.memory_space<smem>>
      %240 = vector.broadcast %239 : f32 to vector<8x128xf32>
      %241 = arith.mulf %206, %240 : vector<8x128xf32>
      %242 = vector.broadcast %236 : f32 to vector<8x128xf32>
      %243 = arith.addf %242, %241 : vector<8x128xf32>
      %c15_i32 = arith.constant 15 : i32
      %244 = arith.addi %172, %c15_i32 : i32
      %245 = arith.index_cast %244 : i32 to index
      %246 = memref.load %arg2[%245] : memref<486xf32, #tpu.memory_space<smem>>
      %247 = vector.broadcast %246 : f32 to vector<8x128xf32>
      %248 = arith.mulf %213, %247 : vector<8x128xf32>
      %249 = arith.addf %243, %248 : vector<8x128xf32>
      %c10_i32 = arith.constant 10 : i32
      %250 = arith.addi %172, %c10_i32 : i32
      %251 = arith.index_cast %250 : i32 to index
      %252 = memref.load %arg2[%251] : memref<486xf32, #tpu.memory_space<smem>>
      %c13_i32 = arith.constant 13 : i32
      %253 = arith.addi %172, %c13_i32 : i32
      %254 = arith.index_cast %253 : i32 to index
      %255 = memref.load %arg2[%254] : memref<486xf32, #tpu.memory_space<smem>>
      %256 = vector.broadcast %255 : f32 to vector<8x128xf32>
      %257 = arith.mulf %206, %256 : vector<8x128xf32>
      %258 = vector.broadcast %252 : f32 to vector<8x128xf32>
      %259 = arith.addf %258, %257 : vector<8x128xf32>
      %c16_i32 = arith.constant 16 : i32
      %260 = arith.addi %172, %c16_i32 : i32
      %261 = arith.index_cast %260 : i32 to index
      %262 = memref.load %arg2[%261] : memref<486xf32, #tpu.memory_space<smem>>
      %263 = vector.broadcast %262 : f32 to vector<8x128xf32>
      %264 = arith.mulf %213, %263 : vector<8x128xf32>
      %265 = arith.addf %259, %264 : vector<8x128xf32>
      %c11_i32 = arith.constant 11 : i32
      %266 = arith.addi %172, %c11_i32 : i32
      %267 = arith.index_cast %266 : i32 to index
      %268 = memref.load %arg2[%267] : memref<486xf32, #tpu.memory_space<smem>>
      %c14_i32 = arith.constant 14 : i32
      %269 = arith.addi %172, %c14_i32 : i32
      %270 = arith.index_cast %269 : i32 to index
      %271 = memref.load %arg2[%270] : memref<486xf32, #tpu.memory_space<smem>>
      %272 = vector.broadcast %271 : f32 to vector<8x128xf32>
      %273 = arith.mulf %206, %272 : vector<8x128xf32>
      %274 = vector.broadcast %268 : f32 to vector<8x128xf32>
      %275 = arith.addf %274, %273 : vector<8x128xf32>
      %c17_i32 = arith.constant 17 : i32
      %276 = arith.addi %172, %c17_i32 : i32
      %277 = arith.index_cast %276 : i32 to index
      %278 = memref.load %arg2[%277] : memref<486xf32, #tpu.memory_space<smem>>
      %279 = vector.broadcast %278 : f32 to vector<8x128xf32>
      %280 = arith.mulf %213, %279 : vector<8x128xf32>
      %281 = arith.addf %275, %280 : vector<8x128xf32>
      %c18_i32 = arith.constant 18 : i32
      %282 = arith.addi %172, %c18_i32 : i32
      %283 = arith.index_cast %282 : i32 to index
      %284 = memref.load %arg2[%283] : memref<486xf32, #tpu.memory_space<smem>>
      %c21_i32 = arith.constant 21 : i32
      %285 = arith.addi %172, %c21_i32 : i32
      %286 = arith.index_cast %285 : i32 to index
      %287 = memref.load %arg2[%286] : memref<486xf32, #tpu.memory_space<smem>>
      %288 = vector.broadcast %287 : f32 to vector<8x128xf32>
      %289 = arith.mulf %206, %288 : vector<8x128xf32>
      %290 = vector.broadcast %284 : f32 to vector<8x128xf32>
      %291 = arith.addf %290, %289 : vector<8x128xf32>
      %c24_i32 = arith.constant 24 : i32
      %292 = arith.addi %172, %c24_i32 : i32
      %293 = arith.index_cast %292 : i32 to index
      %294 = memref.load %arg2[%293] : memref<486xf32, #tpu.memory_space<smem>>
      %295 = vector.broadcast %294 : f32 to vector<8x128xf32>
      %296 = arith.mulf %213, %295 : vector<8x128xf32>
      %297 = arith.addf %291, %296 : vector<8x128xf32>
      %c19_i32 = arith.constant 19 : i32
      %298 = arith.addi %172, %c19_i32 : i32
      %299 = arith.index_cast %298 : i32 to index
      %300 = memref.load %arg2[%299] : memref<486xf32, #tpu.memory_space<smem>>
      %c22_i32 = arith.constant 22 : i32
      %301 = arith.addi %172, %c22_i32 : i32
      %302 = arith.index_cast %301 : i32 to index
      %303 = memref.load %arg2[%302] : memref<486xf32, #tpu.memory_space<smem>>
      %304 = vector.broadcast %303 : f32 to vector<8x128xf32>
      %305 = arith.mulf %206, %304 : vector<8x128xf32>
      %306 = vector.broadcast %300 : f32 to vector<8x128xf32>
      %307 = arith.addf %306, %305 : vector<8x128xf32>
      %c25_i32 = arith.constant 25 : i32
      %308 = arith.addi %172, %c25_i32 : i32
      %309 = arith.index_cast %308 : i32 to index
      %310 = memref.load %arg2[%309] : memref<486xf32, #tpu.memory_space<smem>>
      %311 = vector.broadcast %310 : f32 to vector<8x128xf32>
      %312 = arith.mulf %213, %311 : vector<8x128xf32>
      %313 = arith.addf %307, %312 : vector<8x128xf32>
      %c20_i32 = arith.constant 20 : i32
      %314 = arith.addi %172, %c20_i32 : i32
      %315 = arith.index_cast %314 : i32 to index
      %316 = memref.load %arg2[%315] : memref<486xf32, #tpu.memory_space<smem>>
      %c23_i32 = arith.constant 23 : i32
      %317 = arith.addi %172, %c23_i32 : i32
      %318 = arith.index_cast %317 : i32 to index
      %319 = memref.load %arg2[%318] : memref<486xf32, #tpu.memory_space<smem>>
      %320 = vector.broadcast %319 : f32 to vector<8x128xf32>
      %321 = arith.mulf %206, %320 : vector<8x128xf32>
      %322 = vector.broadcast %316 : f32 to vector<8x128xf32>
      %323 = arith.addf %322, %321 : vector<8x128xf32>
      %c26_i32 = arith.constant 26 : i32
      %324 = arith.addi %172, %c26_i32 : i32
      %325 = arith.index_cast %324 : i32 to index
      %326 = memref.load %arg2[%325] : memref<486xf32, #tpu.memory_space<smem>>
      %327 = vector.broadcast %326 : f32 to vector<8x128xf32>
      %328 = arith.mulf %213, %327 : vector<8x128xf32>
      %329 = arith.addf %323, %328 : vector<8x128xf32>
      %330 = arith.select %233, %223, %224 : vector<8x128xi1>, vector<8x128xf32>
      %c0_65 = arith.constant 0 : index
      %c0_66 = arith.constant 0 : index
      %331 = vector.load %arg7[%c0_65, %c0_66] : memref<8x128xf32, #tpu.memory_space<vmem>>, vector<8x128xf32>
      tpu.vector_store %arg7[%c0_65, %c0_66], %330 {strides = array<i32>} : memref<8x128xf32, #tpu.memory_space<vmem>>, vector<8x128xf32>,
      %c0_67 = arith.constant 0 : index
      %c0_68 = arith.constant 0 : index
      %332 = vector.load %arg8[%c0_67, %c0_68] : memref<8x128xf32, #tpu.memory_space<vmem>>, vector<8x128xf32>
      %333 = arith.select %233, %249, %332 : vector<8x128xi1>, vector<8x128xf32>
      %c0_69 = arith.constant 0 : index
      %c0_70 = arith.constant 0 : index
      %334 = vector.load %arg8[%c0_69, %c0_70] : memref<8x128xf32, #tpu.memory_space<vmem>>, vector<8x128xf32>
      tpu.vector_store %arg8[%c0_69, %c0_70], %333 {strides = array<i32>} : memref<8x128xf32, #tpu.memory_space<vmem>>, vector<8x128xf32>,
      %c0_71 = arith.constant 0 : index
      %c0_72 = arith.constant 0 : index
      %335 = vector.load %arg9[%c0_71, %c0_72] : memref<8x128xf32, #tpu.memory_space<vmem>>, vector<8x128xf32>
      %336 = arith.select %233, %265, %335 : vector<8x128xi1>, vector<8x128xf32>
      %c0_73 = arith.constant 0 : index
      %c0_74 = arith.constant 0 : index
      %337 = vector.load %arg9[%c0_73, %c0_74] : memref<8x128xf32, #tpu.memory_space<vmem>>, vector<8x128xf32>
      tpu.vector_store %arg9[%c0_73, %c0_74], %336 {strides = array<i32>} : memref<8x128xf32, #tpu.memory_space<vmem>>, vector<8x128xf32>,
      %c0_75 = arith.constant 0 : index
      %c0_76 = arith.constant 0 : index
      %338 = vector.load %arg10[%c0_75, %c0_76] : memref<8x128xf32, #tpu.memory_space<vmem>>, vector<8x128xf32>
      %339 = arith.select %233, %281, %338 : vector<8x128xi1>, vector<8x128xf32>
      %c0_77 = arith.constant 0 : index
      %c0_78 = arith.constant 0 : index
      %340 = vector.load %arg10[%c0_77, %c0_78] : memref<8x128xf32, #tpu.memory_space<vmem>>, vector<8x128xf32>
      tpu.vector_store %arg10[%c0_77, %c0_78], %339 {strides = array<i32>} : memref<8x128xf32, #tpu.memory_space<vmem>>, vector<8x128xf32>,
      %c0_79 = arith.constant 0 : index
      %c0_80 = arith.constant 0 : index
      %341 = vector.load %arg11[%c0_79, %c0_80] : memref<8x128xf32, #tpu.memory_space<vmem>>, vector<8x128xf32>
      %342 = arith.select %233, %297, %341 : vector<8x128xi1>, vector<8x128xf32>
      %c0_81 = arith.constant 0 : index
      %c0_82 = arith.constant 0 : index
      %343 = vector.load %arg11[%c0_81, %c0_82] : memref<8x128xf32, #tpu.memory_space<vmem>>, vector<8x128xf32>
      tpu.vector_store %arg11[%c0_81, %c0_82], %342 {strides = array<i32>} : memref<8x128xf32, #tpu.memory_space<vmem>>, vector<8x128xf32>,
      %c0_83 = arith.constant 0 : index
      %c0_84 = arith.constant 0 : index
      %344 = vector.load %arg12[%c0_83, %c0_84] : memref<8x128xf32, #tpu.memory_space<vmem>>, vector<8x128xf32>
      %345 = arith.select %233, %313, %344 : vector<8x128xi1>, vector<8x128xf32>
      %c0_85 = arith.constant 0 : index
      %c0_86 = arith.constant 0 : index
      %346 = vector.load %arg12[%c0_85, %c0_86] : memref<8x128xf32, #tpu.memory_space<vmem>>, vector<8x128xf32>
      tpu.vector_store %arg12[%c0_85, %c0_86], %345 {strides = array<i32>} : memref<8x128xf32, #tpu.memory_space<vmem>>, vector<8x128xf32>,
      %c0_87 = arith.constant 0 : index
      %c0_88 = arith.constant 0 : index
      %347 = vector.load %arg13[%c0_87, %c0_88] : memref<8x128xf32, #tpu.memory_space<vmem>>, vector<8x128xf32>
      %348 = arith.select %233, %329, %347 : vector<8x128xi1>, vector<8x128xf32>
      %c0_89 = arith.constant 0 : index
      %c0_90 = arith.constant 0 : index
      %349 = vector.load %arg13[%c0_89, %c0_90] : memref<8x128xf32, #tpu.memory_space<vmem>>, vector<8x128xf32>
      tpu.vector_store %arg13[%c0_89, %c0_90], %348 {strides = array<i32>} : memref<8x128xf32, #tpu.memory_space<vmem>>, vector<8x128xf32>,
      %c2_i32_91 = arith.constant 2 : i32
      %350 = arith.muli %c2_i32_91, %arg14 : i32
      %351 = arith.addi %36, %350 : i32
      %c1_i32_92 = arith.constant 1 : i32
      %352 = arith.addi %351, %c1_i32_92 : i32
      %353 = arith.index_cast %352 : i32 to index
      %354 = memref.load %arg3[%353] : memref<16xi32, #tpu.memory_space<smem>>
      %c27_i32_93 = arith.constant 27 : i32
      %355 = arith.muli %354, %c27_i32_93 : i32
      %356 = arith.addi %33, %355 : i32
      %c0_i32_94 = arith.constant 0 : i32
      %357 = arith.addi %356, %c0_i32_94 : i32
      %358 = arith.index_cast %357 : i32 to index
      %359 = memref.load %arg2[%358] : memref<486xf32, #tpu.memory_space<smem>>
      %c1_i32_95 = arith.constant 1 : i32
      %360 = arith.addi %356, %c1_i32_95 : i32
      %361 = arith.index_cast %360 : i32 to index
      %362 = memref.load %arg2[%361] : memref<486xf32, #tpu.memory_space<smem>>
      %c2_i32_96 = arith.constant 2 : i32
      %363 = arith.addi %356, %c2_i32_96 : i32
      %364 = arith.index_cast %363 : i32 to index
      %365 = memref.load %arg2[%364] : memref<486xf32, #tpu.memory_space<smem>>
      %c3_i32_97 = arith.constant 3 : i32
      %366 = arith.addi %356, %c3_i32_97 : i32
      %367 = arith.index_cast %366 : i32 to index
      %368 = memref.load %arg2[%367] : memref<486xf32, #tpu.memory_space<smem>>
      %c4_i32_98 = arith.constant 4 : i32
      %369 = arith.addi %356, %c4_i32_98 : i32
      %370 = arith.index_cast %369 : i32 to index
      %371 = memref.load %arg2[%370] : memref<486xf32, #tpu.memory_space<smem>>
      %c5_i32_99 = arith.constant 5 : i32
      %372 = arith.addi %356, %c5_i32_99 : i32
      %373 = arith.index_cast %372 : i32 to index
      %374 = memref.load %arg2[%373] : memref<486xf32, #tpu.memory_space<smem>>
      %c6_i32_100 = arith.constant 6 : i32
      %375 = arith.addi %356, %c6_i32_100 : i32
      %376 = arith.index_cast %375 : i32 to index
      %377 = memref.load %arg2[%376] : memref<486xf32, #tpu.memory_space<smem>>
      %c7_i32_101 = arith.constant 7 : i32
      %378 = arith.addi %356, %c7_i32_101 : i32
      %379 = arith.index_cast %378 : i32 to index
      %380 = memref.load %arg2[%379] : memref<486xf32, #tpu.memory_space<smem>>
      %c8_i32_102 = arith.constant 8 : i32
      %381 = arith.addi %356, %c8_i32_102 : i32
      %382 = arith.index_cast %381 : i32 to index
      %383 = memref.load %arg2[%382] : memref<486xf32, #tpu.memory_space<smem>>
      %384 = vector.broadcast %359 : f32 to vector<8x128xf32>
      %385 = arith.mulf %384, %30 : vector<8x128xf32>
      %386 = vector.broadcast %362 : f32 to vector<8x128xf32>
      %387 = arith.mulf %386, %27 : vector<8x128xf32>
      %388 = arith.addf %385, %387 : vector<8x128xf32>
      %389 = vector.broadcast %365 : f32 to vector<8x128xf32>
      %390 = arith.addf %388, %389 : vector<8x128xf32>
      %391 = vector.broadcast %368 : f32 to vector<8x128xf32>
      %392 = arith.mulf %391, %30 : vector<8x128xf32>
      %393 = vector.broadcast %371 : f32 to vector<8x128xf32>
      %394 = arith.mulf %393, %27 : vector<8x128xf32>
      %395 = arith.addf %392, %394 : vector<8x128xf32>
      %396 = vector.broadcast %374 : f32 to vector<8x128xf32>
      %397 = arith.addf %395, %396 : vector<8x128xf32>
      %cst_103 = arith.constant 1.000000e+00 : f32
      %398 = vector.broadcast %cst_103 : f32 to vector<8x128xf32>
      %399 = arith.subf %398, %390 : vector<8x128xf32>
      %400 = arith.subf %399, %397 : vector<8x128xf32>
      %401 = vector.broadcast %380 : f32 to vector<8x128xf32>
      %402 = arith.mulf %390, %401 : vector<8x128xf32>
      %403 = vector.broadcast %377 : f32 to vector<8x128xf32>
      %404 = arith.addf %403, %402 : vector<8x128xf32>
      %405 = vector.broadcast %383 : f32 to vector<8x128xf32>
      %406 = arith.mulf %397, %405 : vector<8x128xf32>
      %407 = arith.addf %404, %406 : vector<8x128xf32>
      %c0_104 = arith.constant 0 : index
      %c0_105 = arith.constant 0 : index
      %408 = vector.load %arg7[%c0_104, %c0_105] : memref<8x128xf32, #tpu.memory_space<vmem>>, vector<8x128xf32>
      %409 = arith.minimumf %390, %397 : vector<8x128xf32>
      %410 = arith.minimumf %400, %409 : vector<8x128xf32>
      %cst_106 = arith.constant 0.000000e+00 : f32
      %411 = vector.broadcast %cst_106 : f32 to vector<8x128xf32>
      %412 = arith.cmpf oge, %410, %411 : vector<8x128xf32>
      %cst_107 = arith.constant 9.99999974E-6 : f32
      %413 = vector.broadcast %cst_107 : f32 to vector<8x128xf32>
      %414 = arith.cmpf ogt, %407, %413 : vector<8x128xf32>
      %415 = arith.andi %412, %414 : vector<8x128xi1>
      %416 = arith.cmpf olt, %407, %408 : vector<8x128xf32>
      %417 = arith.andi %415, %416 : vector<8x128xi1>
      %c9_i32_108 = arith.constant 9 : i32
      %418 = arith.addi %356, %c9_i32_108 : i32
      %419 = arith.index_cast %418 : i32 to index
      %420 = memref.load %arg2[%419] : memref<486xf32, #tpu.memory_space<smem>>
      %c12_i32_109 = arith.constant 12 : i32
      %421 = arith.addi %356, %c12_i32_109 : i32
      %422 = arith.index_cast %421 : i32 to index
      %423 = memref.load %arg2[%422] : memref<486xf32, #tpu.memory_space<smem>>
      %424 = vector.broadcast %423 : f32 to vector<8x128xf32>
      %425 = arith.mulf %390, %424 : vector<8x128xf32>
      %426 = vector.broadcast %420 : f32 to vector<8x128xf32>
      %427 = arith.addf %426, %425 : vector<8x128xf32>
      %c15_i32_110 = arith.constant 15 : i32
      %428 = arith.addi %356, %c15_i32_110 : i32
      %429 = arith.index_cast %428 : i32 to index
      %430 = memref.load %arg2[%429] : memref<486xf32, #tpu.memory_space<smem>>
      %431 = vector.broadcast %430 : f32 to vector<8x128xf32>
      %432 = arith.mulf %397, %431 : vector<8x128xf32>
      %433 = arith.addf %427, %432 : vector<8x128xf32>
      %c10_i32_111 = arith.constant 10 : i32
      %434 = arith.addi %356, %c10_i32_111 : i32
      %435 = arith.index_cast %434 : i32 to index
      %436 = memref.load %arg2[%435] : memref<486xf32, #tpu.memory_space<smem>>
      %c13_i32_112 = arith.constant 13 : i32
      %437 = arith.addi %356, %c13_i32_112 : i32
      %438 = arith.index_cast %437 : i32 to index
      %439 = memref.load %arg2[%438] : memref<486xf32, #tpu.memory_space<smem>>
      %440 = vector.broadcast %439 : f32 to vector<8x128xf32>
      %441 = arith.mulf %390, %440 : vector<8x128xf32>
      %442 = vector.broadcast %436 : f32 to vector<8x128xf32>
      %443 = arith.addf %442, %441 : vector<8x128xf32>
      %c16_i32_113 = arith.constant 16 : i32
      %444 = arith.addi %356, %c16_i32_113 : i32
      %445 = arith.index_cast %444 : i32 to index
      %446 = memref.load %arg2[%445] : memref<486xf32, #tpu.memory_space<smem>>
      %447 = vector.broadcast %446 : f32 to vector<8x128xf32>
      %448 = arith.mulf %397, %447 : vector<8x128xf32>
      %449 = arith.addf %443, %448 : vector<8x128xf32>
      %c11_i32_114 = arith.constant 11 : i32
      %450 = arith.addi %356, %c11_i32_114 : i32
      %451 = arith.index_cast %450 : i32 to index
      %452 = memref.load %arg2[%451] : memref<486xf32, #tpu.memory_space<smem>>
      %c14_i32_115 = arith.constant 14 : i32
      %453 = arith.addi %356, %c14_i32_115 : i32
      %454 = arith.index_cast %453 : i32 to index
      %455 = memref.load %arg2[%454] : memref<486xf32, #tpu.memory_space<smem>>
      %456 = vector.broadcast %455 : f32 to vector<8x128xf32>
      %457 = arith.mulf %390, %456 : vector<8x128xf32>
      %458 = vector.broadcast %452 : f32 to vector<8x128xf32>
      %459 = arith.addf %458, %457 : vector<8x128xf32>
      %c17_i32_116 = arith.constant 17 : i32
      %460 = arith.addi %356, %c17_i32_116 : i32
      %461 = arith.index_cast %460 : i32 to index
      %462 = memref.load %arg2[%461] : memref<486xf32, #tpu.memory_space<smem>>
      %463 = vector.broadcast %462 : f32 to vector<8x128xf32>
      %464 = arith.mulf %397, %463 : vector<8x128xf32>
      %465 = arith.addf %459, %464 : vector<8x128xf32>
      %c18_i32_117 = arith.constant 18 : i32
      %466 = arith.addi %356, %c18_i32_117 : i32
      %467 = arith.index_cast %466 : i32 to index
      %468 = memref.load %arg2[%467] : memref<486xf32, #tpu.memory_space<smem>>
      %c21_i32_118 = arith.constant 21 : i32
      %469 = arith.addi %356, %c21_i32_118 : i32
      %470 = arith.index_cast %469 : i32 to index
      %471 = memref.load %arg2[%470] : memref<486xf32, #tpu.memory_space<smem>>
      %472 = vector.broadcast %471 : f32 to vector<8x128xf32>
      %473 = arith.mulf %390, %472 : vector<8x128xf32>
      %474 = vector.broadcast %468 : f32 to vector<8x128xf32>
      %475 = arith.addf %474, %473 : vector<8x128xf32>
      %c24_i32_119 = arith.constant 24 : i32
      %476 = arith.addi %356, %c24_i32_119 : i32
      %477 = arith.index_cast %476 : i32 to index
      %478 = memref.load %arg2[%477] : memref<486xf32, #tpu.memory_space<smem>>
      %479 = vector.broadcast %478 : f32 to vector<8x128xf32>
      %480 = arith.mulf %397, %479 : vector<8x128xf32>
      %481 = arith.addf %475, %480 : vector<8x128xf32>
      %c19_i32_120 = arith.constant 19 : i32
      %482 = arith.addi %356, %c19_i32_120 : i32
      %483 = arith.index_cast %482 : i32 to index
      %484 = memref.load %arg2[%483] : memref<486xf32, #tpu.memory_space<smem>>
      %c22_i32_121 = arith.constant 22 : i32
      %485 = arith.addi %356, %c22_i32_121 : i32
      %486 = arith.index_cast %485 : i32 to index
      %487 = memref.load %arg2[%486] : memref<486xf32, #tpu.memory_space<smem>>
      %488 = vector.broadcast %487 : f32 to vector<8x128xf32>
      %489 = arith.mulf %390, %488 : vector<8x128xf32>
      %490 = vector.broadcast %484 : f32 to vector<8x128xf32>
      %491 = arith.addf %490, %489 : vector<8x128xf32>
      %c25_i32_122 = arith.constant 25 : i32
      %492 = arith.addi %356, %c25_i32_122 : i32
      %493 = arith.index_cast %492 : i32 to index
      %494 = memref.load %arg2[%493] : memref<486xf32, #tpu.memory_space<smem>>
      %495 = vector.broadcast %494 : f32 to vector<8x128xf32>
      %496 = arith.mulf %397, %495 : vector<8x128xf32>
      %497 = arith.addf %491, %496 : vector<8x128xf32>
      %c20_i32_123 = arith.constant 20 : i32
      %498 = arith.addi %356, %c20_i32_123 : i32
      %499 = arith.index_cast %498 : i32 to index
      %500 = memref.load %arg2[%499] : memref<486xf32, #tpu.memory_space<smem>>
      %c23_i32_124 = arith.constant 23 : i32
      %501 = arith.addi %356, %c23_i32_124 : i32
      %502 = arith.index_cast %501 : i32 to index
      %503 = memref.load %arg2[%502] : memref<486xf32, #tpu.memory_space<smem>>
      %504 = vector.broadcast %503 : f32 to vector<8x128xf32>
      %505 = arith.mulf %390, %504 : vector<8x128xf32>
      %506 = vector.broadcast %500 : f32 to vector<8x128xf32>
      %507 = arith.addf %506, %505 : vector<8x128xf32>
      %c26_i32_125 = arith.constant 26 : i32
      %508 = arith.addi %356, %c26_i32_125 : i32
      %509 = arith.index_cast %508 : i32 to index
      %510 = memref.load %arg2[%509] : memref<486xf32, #tpu.memory_space<smem>>
      %511 = vector.broadcast %510 : f32 to vector<8x128xf32>
      %512 = arith.mulf %397, %511 : vector<8x128xf32>
      %513 = arith.addf %507, %512 : vector<8x128xf32>
      %514 = arith.select %417, %407, %408 : vector<8x128xi1>, vector<8x128xf32>
      %c0_126 = arith.constant 0 : index
      %c0_127 = arith.constant 0 : index
      %515 = vector.load %arg7[%c0_126, %c0_127] : memref<8x128xf32, #tpu.memory_space<vmem>>, vector<8x128xf32>
      tpu.vector_store %arg7[%c0_126, %c0_127], %514 {strides = array<i32>} : memref<8x128xf32, #tpu.memory_space<vmem>>, vector<8x128xf32>,
      %c0_128 = arith.constant 0 : index
      %c0_129 = arith.constant 0 : index
      %516 = vector.load %arg8[%c0_128, %c0_129] : memref<8x128xf32, #tpu.memory_space<vmem>>, vector<8x128xf32>
      %517 = arith.select %417, %433, %516 : vector<8x128xi1>, vector<8x128xf32>
      %c0_130 = arith.constant 0 : index
      %c0_131 = arith.constant 0 : index
      %518 = vector.load %arg8[%c0_130, %c0_131] : memref<8x128xf32, #tpu.memory_space<vmem>>, vector<8x128xf32>
      tpu.vector_store %arg8[%c0_130, %c0_131], %517 {strides = array<i32>} : memref<8x128xf32, #tpu.memory_space<vmem>>, vector<8x128xf32>,
      %c0_132 = arith.constant 0 : index
      %c0_133 = arith.constant 0 : index
      %519 = vector.load %arg9[%c0_132, %c0_133] : memref<8x128xf32, #tpu.memory_space<vmem>>, vector<8x128xf32>
      %520 = arith.select %417, %449, %519 : vector<8x128xi1>, vector<8x128xf32>
      %c0_134 = arith.constant 0 : index
      %c0_135 = arith.constant 0 : index
      %521 = vector.load %arg9[%c0_134, %c0_135] : memref<8x128xf32, #tpu.memory_space<vmem>>, vector<8x128xf32>
      tpu.vector_store %arg9[%c0_134, %c0_135], %520 {strides = array<i32>} : memref<8x128xf32, #tpu.memory_space<vmem>>, vector<8x128xf32>,
      %c0_136 = arith.constant 0 : index
      %c0_137 = arith.constant 0 : index
      %522 = vector.load %arg10[%c0_136, %c0_137] : memref<8x128xf32, #tpu.memory_space<vmem>>, vector<8x128xf32>
      %523 = arith.select %417, %465, %522 : vector<8x128xi1>, vector<8x128xf32>
      %c0_138 = arith.constant 0 : index
      %c0_139 = arith.constant 0 : index
      %524 = vector.load %arg10[%c0_138, %c0_139] : memref<8x128xf32, #tpu.memory_space<vmem>>, vector<8x128xf32>
      tpu.vector_store %arg10[%c0_138, %c0_139], %523 {strides = array<i32>} : memref<8x128xf32, #tpu.memory_space<vmem>>, vector<8x128xf32>,
      %c0_140 = arith.constant 0 : index
      %c0_141 = arith.constant 0 : index
      %525 = vector.load %arg11[%c0_140, %c0_141] : memref<8x128xf32, #tpu.memory_space<vmem>>, vector<8x128xf32>
      %526 = arith.select %417, %481, %525 : vector<8x128xi1>, vector<8x128xf32>
      %c0_142 = arith.constant 0 : index
      %c0_143 = arith.constant 0 : index
      %527 = vector.load %arg11[%c0_142, %c0_143] : memref<8x128xf32, #tpu.memory_space<vmem>>, vector<8x128xf32>
      tpu.vector_store %arg11[%c0_142, %c0_143], %526 {strides = array<i32>} : memref<8x128xf32, #tpu.memory_space<vmem>>, vector<8x128xf32>,
      %c0_144 = arith.constant 0 : index
      %c0_145 = arith.constant 0 : index
      %528 = vector.load %arg12[%c0_144, %c0_145] : memref<8x128xf32, #tpu.memory_space<vmem>>, vector<8x128xf32>
      %529 = arith.select %417, %497, %528 : vector<8x128xi1>, vector<8x128xf32>
      %c0_146 = arith.constant 0 : index
      %c0_147 = arith.constant 0 : index
      %530 = vector.load %arg12[%c0_146, %c0_147] : memref<8x128xf32, #tpu.memory_space<vmem>>, vector<8x128xf32>
      tpu.vector_store %arg12[%c0_146, %c0_147], %529 {strides = array<i32>} : memref<8x128xf32, #tpu.memory_space<vmem>>, vector<8x128xf32>,
      %c0_148 = arith.constant 0 : index
      %c0_149 = arith.constant 0 : index
      %531 = vector.load %arg13[%c0_148, %c0_149] : memref<8x128xf32, #tpu.memory_space<vmem>>, vector<8x128xf32>
      %532 = arith.select %417, %513, %531 : vector<8x128xi1>, vector<8x128xf32>
      %c0_150 = arith.constant 0 : index
      %c0_151 = arith.constant 0 : index
      %533 = vector.load %arg13[%c0_150, %c0_151] : memref<8x128xf32, #tpu.memory_space<vmem>>, vector<8x128xf32>
      tpu.vector_store %arg13[%c0_150, %c0_151], %532 {strides = array<i32>} : memref<8x128xf32, #tpu.memory_space<vmem>>, vector<8x128xf32>,
    }
    %c0_13 = arith.constant 0 : index
    %c0_14 = arith.constant 0 : index
    %43 = vector.load %arg7[%c0_13, %c0_14] : memref<8x128xf32, #tpu.memory_space<vmem>>, vector<8x128xf32>
    %cst_15 = arith.constant 1.000000e+09 : f32
    %44 = vector.broadcast %cst_15 : f32 to vector<8x128xf32>
    %45 = arith.cmpf olt, %43, %44 : vector<8x128xf32>
    %c0_16 = arith.constant 0 : index
    %c0_17 = arith.constant 0 : index
    %46 = vector.load %arg11[%c0_16, %c0_17] : memref<8x128xf32, #tpu.memory_space<vmem>>, vector<8x128xf32>
    %c0_18 = arith.constant 0 : index
    %c0_19 = arith.constant 0 : index
    %47 = vector.load %arg12[%c0_18, %c0_19] : memref<8x128xf32, #tpu.memory_space<vmem>>, vector<8x128xf32>
    %c0_20 = arith.constant 0 : index
    %c0_21 = arith.constant 0 : index
    %48 = vector.load %arg13[%c0_20, %c0_21] : memref<8x128xf32, #tpu.memory_space<vmem>>, vector<8x128xf32>
    %c0_22 = arith.constant 0 : index
    %c0_23 = arith.constant 0 : index
    %49 = vector.load %arg8[%c0_22, %c0_23] : memref<8x128xf32, #tpu.memory_space<vmem>>, vector<8x128xf32>
    %c0_24 = arith.constant 0 : index
    %c0_25 = arith.constant 0 : index
    %50 = vector.load %arg9[%c0_24, %c0_25] : memref<8x128xf32, #tpu.memory_space<vmem>>, vector<8x128xf32>
    %c0_26 = arith.constant 0 : index
    %c0_27 = arith.constant 0 : index
    %51 = vector.load %arg10[%c0_26, %c0_27] : memref<8x128xf32, #tpu.memory_space<vmem>>, vector<8x128xf32>
    %52 = arith.mulf %46, %46 : vector<8x128xf32>
    %53 = arith.mulf %47, %47 : vector<8x128xf32>
    %54 = arith.addf %52, %53 : vector<8x128xf32>
    %55 = arith.mulf %48, %48 : vector<8x128xf32>
    %56 = arith.addf %54, %55 : vector<8x128xf32>
    %cst_28 = arith.constant 9.99999996E-13 : f32
    %57 = vector.broadcast %cst_28 : f32 to vector<8x128xf32>
    %58 = arith.addf %56, %57 : vector<8x128xf32>
    %59 = math.rsqrt %58 : vector<8x128xf32>
    %60 = arith.mulf %46, %59 : vector<8x128xf32>
    %61 = arith.mulf %47, %59 : vector<8x128xf32>
    %62 = arith.mulf %48, %59 : vector<8x128xf32>
    %c6_i32 = arith.constant 6 : i32
    %63 = arith.muli %arg0, %c6_i32 : i32
    %c0_i32_29 = arith.constant 0 : i32
    %64 = arith.addi %63, %c0_i32_29 : i32
    %65 = arith.index_cast %64 : i32 to index
    %66 = memref.load %arg5[%65] : memref<12xf32, #tpu.memory_space<smem>>
    %c6_i32_30 = arith.constant 6 : i32
    %67 = arith.muli %arg0, %c6_i32_30 : i32
    %c1_i32_31 = arith.constant 1 : i32
    %68 = arith.addi %67, %c1_i32_31 : i32
    %69 = arith.index_cast %68 : i32 to index
    %70 = memref.load %arg5[%69] : memref<12xf32, #tpu.memory_space<smem>>
    %c6_i32_32 = arith.constant 6 : i32
    %71 = arith.muli %arg0, %c6_i32_32 : i32
    %c2_i32 = arith.constant 2 : i32
    %72 = arith.addi %71, %c2_i32 : i32
    %73 = arith.index_cast %72 : i32 to index
    %74 = memref.load %arg5[%73] : memref<12xf32, #tpu.memory_space<smem>>
    %c6_i32_33 = arith.constant 6 : i32
    %75 = arith.muli %arg0, %c6_i32_33 : i32
    %c3_i32 = arith.constant 3 : i32
    %76 = arith.addi %75, %c3_i32 : i32
    %77 = arith.index_cast %76 : i32 to index
    %78 = memref.load %arg5[%77] : memref<12xf32, #tpu.memory_space<smem>>
    %c6_i32_34 = arith.constant 6 : i32
    %79 = arith.muli %arg0, %c6_i32_34 : i32
    %c4_i32 = arith.constant 4 : i32
    %80 = arith.addi %79, %c4_i32 : i32
    %81 = arith.index_cast %80 : i32 to index
    %82 = memref.load %arg5[%81] : memref<12xf32, #tpu.memory_space<smem>>
    %c6_i32_35 = arith.constant 6 : i32
    %83 = arith.muli %arg0, %c6_i32_35 : i32
    %c5_i32 = arith.constant 5 : i32
    %84 = arith.addi %83, %c5_i32 : i32
    %85 = arith.index_cast %84 : i32 to index
    %86 = memref.load %arg5[%85] : memref<12xf32, #tpu.memory_space<smem>>
    %87 = vector.broadcast %78 : f32 to vector<8x128xf32>
    %88 = arith.subf %87, %49 : vector<8x128xf32>
    %89 = vector.broadcast %82 : f32 to vector<8x128xf32>
    %90 = arith.subf %89, %50 : vector<8x128xf32>
    %91 = vector.broadcast %86 : f32 to vector<8x128xf32>
    %92 = arith.subf %91, %51 : vector<8x128xf32>
    %93 = arith.mulf %88, %88 : vector<8x128xf32>
    %94 = arith.mulf %90, %90 : vector<8x128xf32>
    %95 = arith.addf %93, %94 : vector<8x128xf32>
    %96 = arith.mulf %92, %92 : vector<8x128xf32>
    %97 = arith.addf %95, %96 : vector<8x128xf32>
    %cst_36 = arith.constant 9.99999996E-13 : f32
    %98 = vector.broadcast %cst_36 : f32 to vector<8x128xf32>
    %99 = arith.addf %97, %98 : vector<8x128xf32>
    %100 = math.rsqrt %99 : vector<8x128xf32>
    %101 = arith.mulf %88, %100 : vector<8x128xf32>
    %102 = arith.mulf %90, %100 : vector<8x128xf32>
    %103 = arith.mulf %92, %100 : vector<8x128xf32>
    %104 = vector.broadcast %66 : f32 to vector<8x128xf32>
    %105 = arith.subf %104, %49 : vector<8x128xf32>
    %106 = vector.broadcast %70 : f32 to vector<8x128xf32>
    %107 = arith.subf %106, %50 : vector<8x128xf32>
    %108 = vector.broadcast %74 : f32 to vector<8x128xf32>
    %109 = arith.subf %108, %51 : vector<8x128xf32>
    %110 = arith.mulf %105, %105 : vector<8x128xf32>
    %111 = arith.mulf %107, %107 : vector<8x128xf32>
    %112 = arith.addf %110, %111 : vector<8x128xf32>
    %113 = arith.mulf %109, %109 : vector<8x128xf32>
    %114 = arith.addf %112, %113 : vector<8x128xf32>
    %cst_37 = arith.constant 9.99999996E-13 : f32
    %115 = vector.broadcast %cst_37 : f32 to vector<8x128xf32>
    %116 = arith.addf %114, %115 : vector<8x128xf32>
    %117 = math.rsqrt %116 : vector<8x128xf32>
    %118 = arith.mulf %105, %117 : vector<8x128xf32>
    %119 = arith.mulf %107, %117 : vector<8x128xf32>
    %120 = arith.mulf %109, %117 : vector<8x128xf32>
    %121 = arith.mulf %60, %101 : vector<8x128xf32>
    %122 = arith.mulf %61, %102 : vector<8x128xf32>
    %123 = arith.addf %121, %122 : vector<8x128xf32>
    %124 = arith.mulf %62, %103 : vector<8x128xf32>
    %125 = arith.addf %123, %124 : vector<8x128xf32>
    %cst_38 = arith.constant 2.000000e+00 : f32
    %126 = vector.broadcast %cst_38 : f32 to vector<8x128xf32>
    %127 = arith.mulf %126, %125 : vector<8x128xf32>
    %128 = arith.mulf %127, %60 : vector<8x128xf32>
    %129 = arith.subf %128, %101 : vector<8x128xf32>
    %cst_39 = arith.constant 2.000000e+00 : f32
    %130 = vector.broadcast %cst_39 : f32 to vector<8x128xf32>
    %131 = arith.mulf %130, %125 : vector<8x128xf32>
    %132 = arith.mulf %131, %61 : vector<8x128xf32>
    %133 = arith.subf %132, %102 : vector<8x128xf32>
    %cst_40 = arith.constant 2.000000e+00 : f32
    %134 = vector.broadcast %cst_40 : f32 to vector<8x128xf32>
    %135 = arith.mulf %134, %125 : vector<8x128xf32>
    %136 = arith.mulf %135, %62 : vector<8x128xf32>
    %137 = arith.subf %136, %103 : vector<8x128xf32>
    %138 = arith.mulf %129, %118 : vector<8x128xf32>
    %139 = arith.mulf %133, %119 : vector<8x128xf32>
    %140 = arith.addf %138, %139 : vector<8x128xf32>
    %141 = arith.mulf %137, %120 : vector<8x128xf32>
    %142 = arith.addf %140, %141 : vector<8x128xf32>
    %cst_41 = arith.constant 0.000000e+00 : f32
    %143 = vector.broadcast %cst_41 : f32 to vector<8x128xf32>
    %144 = arith.maximumf %142, %143 : vector<8x128xf32>
    %145 = arith.mulf %144, %144 : vector<8x128xf32>
    %146 = arith.mulf %145, %145 : vector<8x128xf32>
    %147 = arith.mulf %146, %146 : vector<8x128xf32>
    %148 = arith.mulf %147, %147 : vector<8x128xf32>
    %149 = arith.mulf %148, %148 : vector<8x128xf32>
    %150 = arith.mulf %149, %149 : vector<8x128xf32>
    %cst_42 = arith.constant 0.000000e+00 : f32
    %151 = vector.broadcast %cst_42 : f32 to vector<8x128xf32>
    %152 = arith.maximumf %125, %151 : vector<8x128xf32>
    %cst_43 = arith.constant 3.000000e-01 : f32
    %153 = vector.broadcast %cst_43 : f32 to vector<8x128xf32>
    %154 = arith.mulf %153, %152 : vector<8x128xf32>
    %cst_44 = arith.constant 5.000000e-01 : f32
    %155 = vector.broadcast %cst_44 : f32 to vector<8x128xf32>
    %156 = arith.addf %155, %154 : vector<8x128xf32>
    %cst_45 = arith.constant 2.000000e-01 : f32
    %157 = vector.broadcast %cst_45 : f32 to vector<8x128xf32>
    %158 = arith.mulf %157, %150 : vector<8x128xf32>
    %159 = arith.addf %156, %158 : vector<8x128xf32>
    %cst_46 = arith.constant 2.550000e+02 : f32
    %160 = vector.broadcast %cst_46 : f32 to vector<8x128xf32>
    %161 = arith.mulf %159, %160 : vector<8x128xf32>
    %cst_47 = arith.constant 0.000000e+00 : f32
    %162 = vector.broadcast %cst_47 : f32 to vector<8x128xf32>
    %163 = arith.select %45, %161, %162 : vector<8x128xi1>, vector<8x128xf32>
    %c0_48 = arith.constant 0 : index
    %c0_49 = arith.constant 0 : index
    %c0_50 = arith.constant 0 : index
    %164 = vector.load %arg6[%c0_48, %c0_49, %c0_50] : memref<1x8x128xf32, #tpu.memory_space<vmem>>, vector<1x8x128xf32>
    %165 = vector.shape_cast %164 : vector<1x8x128xf32> to vector<8x128xf32>
    %166 = vector.shape_cast %163 : vector<8x128xf32> to vector<1x8x128xf32>
    tpu.vector_store %arg6[%c0_48, %c0_49, %c0_50], %166 {strides = array<i32>} : memref<1x8x128xf32, #tpu.memory_space<vmem>>, vector<1x8x128xf32>,
    return
  }
  func.func @transform_0(%arg0: i32, %arg1: i32) -> i32 {
    %c0_i32 = arith.constant 0 : i32
    %c0_i32_0 = arith.constant 0 : i32
    return %c0_i32 : i32
  }
  func.func @transform_1(%arg0: i32, %arg1: i32) -> i32 {
    %c0_i32 = arith.constant 0 : i32
    %c0_i32_0 = arith.constant 0 : i32
    return %c0_i32 : i32
  }
  func.func @transform_2(%arg0: i32, %arg1: i32) -> i32 {
    %c0_i32 = arith.constant 0 : i32
    %c0_i32_0 = arith.constant 0 : i32
    return %c0_i32 : i32
  }
  func.func @transform_3(%arg0: i32, %arg1: i32) -> i32 {
    %c0_i32 = arith.constant 0 : i32
    %c0_i32_0 = arith.constant 0 : i32
    return %c0_i32 : i32
  }
  func.func @transform_4(%arg0: i32, %arg1: i32) -> (i32, i32, i32) {
    %c0_i32 = arith.constant 0 : i32
    %c0_i32_0 = arith.constant 0 : i32
    return %arg0, %arg1, %c0_i32 : i32, i32, i32
  }
}

</mosaic_0001>

<llo_original>
// kernel: tpu_custom_call.1
$region0: #{tpu_custom_call.1}
  #allocation0 [shape = 'u32[]', space=smem, size = 0x4, offset = 0x4, fixed_abs, tag = 'smem constant byte address 0x4 - core index']
  #allocation1 [shape = 'u32[144,128]{1,0:T(1,128)}', space=vmem, size = 0x12000, scoped, tag = 'internal scratch']
  #allocation2 [shape = 'f32[8,128]{1,0:T(8,128)}', space=vmem, size = 0x1000, scoped, tag = 'scratch operand']
  #allocation3 [shape = 'f32[8,128]{1,0:T(8,128)}', space=vmem, size = 0x1000, scoped, tag = 'scratch operand']
  #allocation4 [shape = 'f32[8,128]{1,0:T(8,128)}', space=vmem, size = 0x1000, scoped, tag = 'scratch operand']
  #allocation5 [shape = 'f32[8,128]{1,0:T(8,128)}', space=vmem, size = 0x1000, scoped, tag = 'scratch operand']
  #allocation6 [shape = 'f32[8,128]{1,0:T(8,128)}', space=vmem, size = 0x1000, scoped, tag = 'scratch operand']
  #allocation7 [shape = 'f32[8,128]{1,0:T(8,128)}', space=vmem, size = 0x1000, scoped, tag = 'scratch operand']
  #allocation8 [shape = 'f32[8,128]{1,0:T(8,128)}', space=vmem, size = 0x1000, scoped, tag = 'scratch operand']
  %s0 = inlined_call_operand.hbm [shape: f32[486], index: 0, kind: input, shape index: {}]
  %s1 = inlined_call_operand.vmem [shape: s32[16], index: 1, kind: input, shape index: {}]
  %s2 = inlined_call_operand.vmem [shape: s32[2], index: 2, kind: input, shape index: {}]
  %s3 = inlined_call_operand.vmem [shape: f32[12], index: 3, kind: input, shape index: {}]
  %s4 = inlined_call_operand.hbm [shape: f32[2,8,128], index: 4, kind: output, shape index: {}]
  %s5 = sld [smem:[#allocation0]]
  $region72: #{tpu_custom_call.1} parent=0
    _
  %s7 = ssub.s32 1, %s5
  %s8 = scalar_select 0, %s7, %s5
  $region1: #{tpu_custom_call.1} parent=0
    #allocation9 [shape = 'u8[2048]{0}', space=smem, size = 0x800, scoped, tag = 'input window, operand 0, single buffered']
    #allocation10 [shape = 's32[2]{0}', space=sflag, size = 0x8, scoped, tag = 'scoped memory for tpu_custom_call.1']
    #allocation11 [shape = 's32[2]{0}', space=sflag, size = 0x8, scoped, tag = 'scoped memory for tpu_custom_call.1']
    #allocation12 [shape = 's32[2]{0}', space=sflag, size = 0x8, scoped, tag = 'scoped memory for tpu_custom_call.1']
    #allocation13 [shape = 'u8[512]{0}', space=smem, size = 0x200, scoped, tag = 'input window, operand 1, single buffered']
    #allocation14 [shape = 'u8[512]{0}', space=smem, size = 0x200, scoped, tag = 'input window, operand 2, single buffered']
    #allocation15 [shape = 's32[1]{0}', space=sflag, size = 0x4, scoped, tag = 'scoped memory for tpu_custom_call.1']
    #allocation16 [shape = 'u8[512]{0}', space=smem, size = 0x200, scoped, tag = 'input window, operand 3, single buffered']
    #allocation17 [shape = 'u8[8192]{0}', space=vmem, size = 0x2000, scoped, tag = 'output window, operand 0']
    %9 = vsyncpa [#allocation11], 0
    %10 = vsyncpa [#allocation12], 0
    %11 = vsyncpa [#allocation15], 0
    %12 = vsyncpa [#allocation10], 0
    %s13 = scalar_lea.sflag [#allocation10], 1
    %14 = vsyncpa %s13, 0
    loop: start=0, step=1, limit=4
    $region2: #{tpu_custom_call.1} parent=1 // loop_pre_header
      _
    $region3: #{tpu_custom_call.1} parent=1 // loop_header
      %s16 = sphi 0, %s20
      %p17 = scmp.ge.s32.totalorder %s16, 4
      %s23 = sphi 0, %s35
      %s24 = sphi 0, %s31
      %s25 = sphi 0, %s23
      %s26 = sphi 0, %s24
      %s27 = sphi 0, %s25
      %s28 = sphi 0, %s26
      %s36 = sphi 0, %s36
      %s38 = sphi 0, %s36
      %s39 = sphi 0, %s38
      %s53 = sphi 0, %s39
      %s57 = sphi 0, %s57
      %s59 = sphi 0, %s57
      %s60 = sphi 0, %s59
      %s74 = sphi 0, %s60
      %s78 = sphi 0, %s78
      %s80 = sphi 0, %s78
      %s81 = sphi 0, %s80
      %s95 = sphi 0, %s81
      %s99 = sphi 0, %s99
      %s101 = sphi 0, %s99
      %s102 = sphi 0, %s101
      %s116 = sphi 0, %s102
      %s124 = sphi 0, %s126
      %s127 = sphi 0, %s124
      %s128 = sphi 0, %s127
      %s144 = sphi 0, %s128
    $region4: #{tpu_custom_call.1} parent=1 // loop_header_branch
      %19 = sbr.rel (%p17) target = $region8
    $region5: #{tpu_custom_call.1} parent=1 // loop_body
      %s21 = ssub.s32 %s16, 1
      %s22 = ssub.s32 %s16, 2
      %s29 = sadd.s32 1, %s24
      %p30 = scmp.ge.s32.totalorder %s29, 1
      %s31 = scalar_select %p30, 0, %s29
      %s32 = sadd.s32 1, %s23
      %s33 = scalar_select %p30, %s32, %s23
      %p34 = scmp.ge.s32.totalorder %s33, 2
      %s35 = scalar_select %p34, 0, %s33
      %s37 = sadd.s32 %s36, 1
      %p40 = scmp.eq.s32.totalorder %s16, 1
      %p41 = scmp.ne.s32.totalorder %s36, %s38
      %p42 = scmp.eq.s32.totalorder %s16, 0
      %p43 = por %p41, %p42
      %p44 = scmp.ne.s32.totalorder %s36, %s38
      %p45 = scmp.eq.s32.totalorder %s21, 1
      %p46 = por %p44, %p45
      %p47 = scmp.ne.s32.totalorder %s38, %s39
      %p48 = scmp.eq.s32.totalorder %s21, 0
      %p49 = por %p47, %p48
      %p50 = scmp.ne.s32.totalorder %s38, %s39
      %p51 = scmp.eq.s32.totalorder %s22, 1
      %p52 = por %p50, %p51
      %p54 = scmp.ne.s32.totalorder %s39, %s53
      %p55 = scmp.eq.s32.totalorder %s22, 0
      %p56 = por %p54, %p55
      %s58 = sadd.s32 %s57, 1
      %p61 = scmp.eq.s32.totalorder %s16, 1
      %p62 = scmp.ne.s32.totalorder %s57, %s59
      %p63 = scmp.eq.s32.totalorder %s16, 0
      %p64 = por %p62, %p63
      %p65 = scmp.ne.s32.totalorder %s57, %s59
      %p66 = scmp.eq.s32.totalorder %s21, 1
      %p67 = por %p65, %p66
      %p68 = scmp.ne.s32.totalorder %s59, %s60
      %p69 = scmp.eq.s32.totalorder %s21, 0
      %p70 = por %p68, %p69
      %p71 = scmp.ne.s32.totalorder %s59, %s60
      %p72 = scmp.eq.s32.totalorder %s22, 1
      %p73 = por %p71, %p72
      %p75 = scmp.ne.s32.totalorder %s60, %s74
      %p76 = scmp.eq.s32.totalorder %s22, 0
      %p77 = por %p75, %p76
      %s79 = sadd.s32 %s78, 1
      %p82 = scmp.eq.s32.totalorder %s16, 1
      %p83 = scmp.ne.s32.totalorder %s78, %s80
      %p84 = scmp.eq.s32.totalorder %s16, 0
      %p85 = por %p83, %p84
      %p86 = scmp.ne.s32.totalorder %s78, %s80
      %p87 = scmp.eq.s32.totalorder %s21, 1
      %p88 = por %p86, %p87
      %p89 = scmp.ne.s32.totalorder %s80, %s81
      %p90 = scmp.eq.s32.totalorder %s21, 0
      %p91 = por %p89, %p90
      %p92 = scmp.ne.s32.totalorder %s80, %s81
      %p93 = scmp.eq.s32.totalorder %s22, 1
      %p94 = por %p92, %p93
      %p96 = scmp.ne.s32.totalorder %s81, %s95
      %p97 = scmp.eq.s32.totalorder %s22, 0
      %p98 = por %p96, %p97
      %s100 = sadd.s32 %s99, 1
      %p103 = scmp.eq.s32.totalorder %s16, 1
      %p104 = scmp.ne.s32.totalorder %s99, %s101
      %p105 = scmp.eq.s32.totalorder %s16, 0
      %p106 = por %p104, %p105
      %p107 = scmp.ne.s32.totalorder %s99, %s101
      %p108 = scmp.eq.s32.totalorder %s21, 1
      %p109 = por %p107, %p108
      %p110 = scmp.ne.s32.totalorder %s101, %s102
      %p111 = scmp.eq.s32.totalorder %s21, 0
      %p112 = por %p110, %p111
      %p113 = scmp.ne.s32.totalorder %s101, %s102
      %p114 = scmp.eq.s32.totalorder %s22, 1
      %p115 = por %p113, %p114
      %p117 = scmp.ne.s32.totalorder %s102, %s116
      %p118 = scmp.eq.s32.totalorder %s22, 0
      %p119 = por %p117, %p118
      %s120 = ssub.s32 %s23, %s35
      %s121 = ssub.s32 %s24, %s31
      %s122 = sor.u32 %s120, %s121
      %p123 = scmp.eq.s32.totalorder %s122, 0
      %s125 = sadd.s32 %s124, 1
      %s126 = scalar_select %p123, %s124, %s125
      %p129 = pneg %p123
      %p130 = scmp.eq.s32.totalorder %s16, 1
      %p131 = por %p129, %p130
      %p132 = scmp.ne.s32.totalorder %s124, %s127
      %p133 = scmp.eq.s32.totalorder %s16, 0
      %p134 = por %p132, %p133
      %p135 = scmp.ne.s32.totalorder %s124, %s127
      %p136 = scmp.eq.s32.totalorder %s21, 1
      %p137 = por %p135, %p136
      %p138 = scmp.ne.s32.totalorder %s127, %s128
      %p139 = scmp.eq.s32.totalorder %s21, 0
      %p140 = por %p138, %p139
      %p141 = scmp.ne.s32.totalorder %s127, %s128
      %p142 = scmp.eq.s32.totalorder %s22, 1
      %p143 = por %p141, %p142
      %p145 = scmp.ne.s32.totalorder %s128, %s144
      %p146 = scmp.eq.s32.totalorder %s22, 0
      %p147 = por %p145, %p146
      %p148 = scmp.le.s32.totalorder 1, %s16
      %p149 = scmp.lt.s32.totalorder %s16, 3
      %p150 = pnand %p148, %p149
      %p151 = pneg %p150
      // Predicated region
      $region9: #{tpu_custom_call.1} parent=5 // pred_check
        _
      $region10: #{tpu_custom_call.1} parent=5 // pred_check_branch
        %153 = sbr.rel (%p150) target = $region12
      $region11: #{tpu_custom_call.1} parent=5 // pred_region
        %s154 = ssub.s32 %s16, 1
        // Predicated region
        $region13: #{tpu_custom_call.1} parent=11 // pred_check
          %p155 = pneg %p49
        $region14: #{tpu_custom_call.1} parent=11 // pred_check_branch
          %157 = sbr.rel (%p155) target = $region16
        $region15: #{tpu_custom_call.1} parent=11 // pred_region
          %s159 = ssub.s32 64, 64
          %160 = vsyncadd [#allocation11], %s159
          %163 = dma.hbm_to_smem %s0, 64, [#allocation9], [#allocation11]
        $region16: #{tpu_custom_call.1} parent=11 // pred_fallthru
          _
        // Predicated region
        $region17: #{tpu_custom_call.1} parent=11 // pred_check
          %p164 = pneg %p70
        $region18: #{tpu_custom_call.1} parent=11 // pred_check_branch
          %166 = sbr.rel (%p164) target = $region20
        $region19: #{tpu_custom_call.1} parent=11 // pred_region
          %s168 = ssub.s32 16, 16
          %169 = vsyncadd [#allocation12], %s168
          %s171 = sshll.u32 %s1, 4
          %s172 = int_to_ptr.vmem [resolvable:$true] %s171
          %174 = dma.vmem_to_smem %s172, 16, [#allocation13], [#allocation12]
        $region20: #{tpu_custom_call.1} parent=11 // pred_fallthru
          _
        // Predicated region
        $region21: #{tpu_custom_call.1} parent=11 // pred_check
          %p175 = pneg %p91
        $region22: #{tpu_custom_call.1} parent=11 // pred_check_branch
          %177 = sbr.rel (%p175) target = $region24
        $region23: #{tpu_custom_call.1} parent=11 // pred_region
          %s179 = ssub.s32 16, 16
          %180 = vsyncadd [#allocation15], %s179
          %s182 = sshll.u32 %s2, 4
          %s183 = int_to_ptr.vmem [resolvable:$true] %s182
          %185 = dma.vmem_to_smem %s183, 16, [#allocation14], [#allocation15]
        $region24: #{tpu_custom_call.1} parent=11 // pred_fallthru
          _
        // Predicated region
        $region25: #{tpu_custom_call.1} parent=11 // pred_check
          %p186 = pneg %p112
        $region26: #{tpu_custom_call.1} parent=11 // pred_check_branch
          %188 = sbr.rel (%p186) target = $region28
        $region27: #{tpu_custom_call.1} parent=11 // pred_region
          %s190 = ssub.s32 16, 16
          %191 = vsyncadd [#allocation15], %s190
          %s193 = sshll.u32 %s3, 4
          %s194 = int_to_ptr.vmem [resolvable:$true] %s193
          %196 = dma.vmem_to_smem %s194, 16, [#allocation16], [#allocation15]
        $region28: #{tpu_custom_call.1} parent=11 // pred_fallthru
          _
      $region12: #{tpu_custom_call.1} parent=5 // pred_fallthru
        _
      %p197 = scmp.lt.s32.totalorder %s16, 2
      // Predicated region
      $region29: #{tpu_custom_call.1} parent=5 // pred_check
        %p198 = pneg %p197
      $region30: #{tpu_custom_call.1} parent=5 // pred_check_branch
        %200 = sbr.rel (%p198) target = $region32
      $region31: #{tpu_custom_call.1} parent=5 // pred_region
        _
      $region32: #{tpu_custom_call.1} parent=5 // pred_fallthru
        _
      %p201 = scmp.le.s32.totalorder 1, %s16
      %p202 = scmp.lt.s32.totalorder %s16, 3
      %p203 = pnand %p201, %p202
      %p204 = pneg %p203
      // Predicated region
      $region33: #{tpu_custom_call.1} parent=5 // pred_check
        _
      $region34: #{tpu_custom_call.1} parent=5 // pred_check_branch
        %206 = sbr.rel (%p203) target = $region36
      $region35: #{tpu_custom_call.1} parent=5 // pred_region
        %s207 = ssub.s32 %s16, 1
        // Predicated region
        $region37: #{tpu_custom_call.1} parent=35 // pred_check
          %p208 = pneg %p49
        $region38: #{tpu_custom_call.1} parent=35 // pred_check_branch
          %210 = sbr.rel (%p208) target = $region40
        $region39: #{tpu_custom_call.1} parent=35 // pred_region
          %211 = dma.done [#allocation11], 64
        $region40: #{tpu_custom_call.1} parent=35 // pred_fallthru
          _
        // Predicated region
        $region41: #{tpu_custom_call.1} parent=35 // pred_check
          %p212 = pneg %p70
        $region42: #{tpu_custom_call.1} parent=35 // pred_check_branch
          %214 = sbr.rel (%p212) target = $region44
        $region43: #{tpu_custom_call.1} parent=35 // pred_region
          %215 = dma.done [#allocation12], 16
        $region44: #{tpu_custom_call.1} parent=35 // pred_fallthru
          _
        // Predicated region
        $region45: #{tpu_custom_call.1} parent=35 // pred_check
          %p216 = pneg %p91
        $region46: #{tpu_custom_call.1} parent=35 // pred_check_branch
          %218 = sbr.rel (%p216) target = $region48
        $region47: #{tpu_custom_call.1} parent=35 // pred_region
          %219 = dma.done [#allocation15], 16
        $region48: #{tpu_custom_call.1} parent=35 // pred_fallthru
          _
        // Predicated region
        $region49: #{tpu_custom_call.1} parent=35 // pred_check
          %p220 = pneg %p112
        $region50: #{tpu_custom_call.1} parent=35 // pred_check_branch
          %222 = sbr.rel (%p220) target = $region52
        $region51: #{tpu_custom_call.1} parent=35 // pred_region
          %223 = dma.done [#allocation15], 16
        $region52: #{tpu_custom_call.1} parent=35 // pred_fallthru
          _
        %224 = sfence
        %p225 = pneg %p49
        %p226 = pneg %p46
        %p227 = pneg %p70
        %p228 = pneg %p67
        %p229 = pneg %p91
        %p230 = pneg %p88
        %p231 = pneg %p112
        %p232 = pneg %p109
        %p233 = pneg %p140
        %p234 = pneg %p137
        %s235 = sand.u32 %s127, 1
        %s236 = scalar_lea.sflag [#allocation10], %s235
        %s237 = sand.u32 %s127, 1
        %s238 = smul.addr %s237, 8
        %s239 = scalar_lea.vmem [#allocation17], %s238
        %v240 = vlaneseq
        %v241 = vshrl.u32 %v240, 7
        %v242 = vlaneseq
        %v243 = vand.u32 %v242, 127
        %s244 = smul.u32 %s26, 8
        %v245 = vstv %s244
        %v246 = vadd.s32 %v245, %v241
        %v247 = vmul.u32 %v246, 128
        %v248 = vadd.s32 %v247, %v243
        %v249 = vcvt.s32.f32 %v248
        %v250 = vrcp.pop 32.0
        %v251 = vmul.f32 %v249, %v250
        %v252 = vfloor.f32 %v251
        %v253 = vmul.f32 %v252, 32.0
        %v254 = vsub.f32 %v249, %v253
        %vm255 = vcmp.ge.f32.partialorder %v254, 32.0
        %v256 = vadd.f32 %v252, 1.0
        %v257 = vsel %vm255, %v256, %v252
        %v258 = vsub.f32 %v254, 32.0
        %v259 = vsel %vm255, %v258, %v254
        %vm260 = vcmp.lt.f32.partialorder %v259, 0.0
        %v261 = vsub.f32 %v257, 1.0
        %v262 = vsel %vm260, %v261, %v257
        %v263 = vadd.f32 %v259, 32.0
        %v264 = vsel %vm260, %v263, %v259
        %265 = vst [vmem:[#allocation2] sm:$0xff] 1e+10
        %s266 = smul.u32 %s25, 243
        %s267 = sadd.s32 %s25, %s26
        %s268 = smul.u32 %s267, 8
        %s269 = sld [smem:[#allocation14 + %s267]]
        // While loop
        $region53: #{tpu_custom_call.1} parent=35 // loop_pre_header
          _
        $region54: #{tpu_custom_call.1} parent=35 // loop_header
          %s271 = sphi 0, %s273
          %p272 = scmp.ge.s32.totalorder %s271, %s269
        $region55: #{tpu_custom_call.1} parent=35 // loop_header_branch
          %275 = sbr.rel (%p272) target = $region59
        $region56: #{tpu_custom_call.1} parent=35 // loop_body
          %s276 = smul.u32 %s271, 2
          %s277 = sadd.s32 %s268, %s276
          %s278 = sld [smem:[#allocation13 + %s277]]
          %s279 = smul.u32 %s278, 27
          %s280 = sadd.s32 %s266, %s279
          %s281 = sld [smem:[#allocation9 + %s280]]
          %s282 = sadd.s32 %s280, 1
          %s283 = sld [smem:[#allocation9 + %s282]]
          %s284 = sadd.s32 %s280, 2
          %s285 = sld [smem:[#allocation9 + %s284]]
          %s286 = sadd.s32 %s280, 3
          %s287 = sld [smem:[#allocation9 + %s286]]
          %s288 = sadd.s32 %s280, 4
          %s289 = sld [smem:[#allocation9 + %s288]]
          %s290 = sadd.s32 %s280, 5
          %s291 = sld [smem:[#allocation9 + %s290]]
          %s292 = sadd.s32 %s280, 6
          %s293 = sld [smem:[#allocation9 + %s292]]
          %s294 = sadd.s32 %s280, 7
          %s295 = sld [smem:[#allocation9 + %s294]]
          %s296 = sadd.s32 %s280, 8
          %s297 = sld [smem:[#allocation9 + %s296]]
          %v298 = vstv %s281
          %v299 = vmul.f32 %v298, %v264
          %v300 = vstv %s283
          %v301 = vmul.f32 %v300, %v262
          %v302 = vadd.f32 %v299, %v301
          %v303 = vstv %s285
          %v304 = vadd.f32 %v302, %v303
          %v305 = vstv %s287
          %v306 = vmul.f32 %v305, %v264
          %v307 = vstv %s289
          %v308 = vmul.f32 %v307, %v262
          %v309 = vadd.f32 %v306, %v308
          %v310 = vstv %s291
          %v311 = vadd.f32 %v309, %v310
          %v312 = vsub.f32 1.0, %v304
          %v313 = vsub.f32 %v312, %v311
          %v314 = vstv %s295
          %v315 = vmul.f32 %v304, %v314
          %v316 = vstv %s293
          %v317 = vadd.f32 %v316, %v315
          %v318 = vstv %s297
          %v319 = vmul.f32 %v311, %v318
          %v320 = vadd.f32 %v317, %v319
          %v321 = vld [vmem:[#allocation2] sm:$0xff]
          %v322 = vmin.f32 %v304, %v311
          %v323 = vmin.f32 %v313, %v322
          %vm324 = vcmp.ge.f32.partialorder %v323, 0.0
          %vm325 = vcmp.gt.f32.partialorder %v320, 1e-05
          %vm326 = vmand %vm324, %vm325
          %vm327 = vcmp.lt.f32.partialorder %v320, %v321
          %vm328 = vmand %vm326, %vm327
          %s329 = sadd.s32 %s280, 9
          %s330 = sld [smem:[#allocation9 + %s329]]
          %s331 = sadd.s32 %s280, 12
          %s332 = sld [smem:[#allocation9 + %s331]]
          %v333 = vstv %s332
          %v334 = vmul.f32 %v304, %v333
          %v335 = vstv %s330
          %v336 = vadd.f32 %v335, %v334
          %s337 = sadd.s32 %s280, 15
          %s338 = sld [smem:[#allocation9 + %s337]]
          %v339 = vstv %s338
          %v340 = vmul.f32 %v311, %v339
          %v341 = vadd.f32 %v336, %v340
          %s342 = sadd.s32 %s280, 10
          %s343 = sld [smem:[#allocation9 + %s342]]
          %s344 = sadd.s32 %s280, 13
          %s345 = sld [smem:[#allocation9 + %s344]]
          %v346 = vstv %s345
          %v347 = vmul.f32 %v304, %v346
          %v348 = vstv %s343
          %v349 = vadd.f32 %v348, %v347
          %s350 = sadd.s32 %s280, 16
          %s351 = sld [smem:[#allocation9 + %s350]]
          %v352 = vstv %s351
          %v353 = vmul.f32 %v311, %v352
          %v354 = vadd.f32 %v349, %v353
          %s355 = sadd.s32 %s280, 11
          %s356 = sld [smem:[#allocation9 + %s355]]
          %s357 = sadd.s32 %s280, 14
          %s358 = sld [smem:[#allocation9 + %s357]]
          %v359 = vstv %s358
          %v360 = vmul.f32 %v304, %v359
          %v361 = vstv %s356
          %v362 = vadd.f32 %v361, %v360
          %s363 = sadd.s32 %s280, 17
          %s364 = sld [smem:[#allocation9 + %s363]]
          %v365 = vstv %s364
          %v366 = vmul.f32 %v311, %v365
          %v367 = vadd.f32 %v362, %v366
          %s368 = sadd.s32 %s280, 18
          %s369 = sld [smem:[#allocation9 + %s368]]
          %s370 = sadd.s32 %s280, 21
          %s371 = sld [smem:[#allocation9 + %s370]]
          %v372 = vstv %s371
          %v373 = vmul.f32 %v304, %v372
          %v374 = vstv %s369
          %v375 = vadd.f32 %v374, %v373
          %s376 = sadd.s32 %s280, 24
          %s377 = sld [smem:[#allocation9 + %s376]]
          %v378 = vstv %s377
          %v379 = vmul.f32 %v311, %v378
          %v380 = vadd.f32 %v375, %v379
          %s381 = sadd.s32 %s280, 19
          %s382 = sld [smem:[#allocation9 + %s381]]
          %s383 = sadd.s32 %s280, 22
          %s384 = sld [smem:[#allocation9 + %s383]]
          %v385 = vstv %s384
          %v386 = vmul.f32 %v304, %v385
          %v387 = vstv %s382
          %v388 = vadd.f32 %v387, %v386
          %s389 = sadd.s32 %s280, 25
          %s390 = sld [smem:[#allocation9 + %s389]]
          %v391 = vstv %s390
          %v392 = vmul.f32 %v311, %v391
          %v393 = vadd.f32 %v388, %v392
          %s394 = sadd.s32 %s280, 20
          %s395 = sld [smem:[#allocation9 + %s394]]
          %s396 = sadd.s32 %s280, 23
          %s397 = sld [smem:[#allocation9 + %s396]]
          %v398 = vstv %s397
          %v399 = vmul.f32 %v304, %v398
          %v400 = vstv %s395
          %v401 = vadd.f32 %v400, %v399
          %s402 = sadd.s32 %s280, 26
          %s403 = sld [smem:[#allocation9 + %s402]]
          %v404 = vstv %s403
          %v405 = vmul.f32 %v311, %v404
          %v406 = vadd.f32 %v401, %v405
          %v407 = vsel %vm328, %v320, %v321
          %408 = vst [vmem:[#allocation2] sm:$0xff] %v407
          %v409 = vld [vmem:[#allocation3] sm:$0xff]
          %v410 = vsel %vm328, %v341, %v409
          %411 = vst [vmem:[#allocation3] sm:$0xff] %v410
          %v412 = vld [vmem:[#allocation4] sm:$0xff]
          %v413 = vsel %vm328, %v354, %v412
          %414 = vst [vmem:[#allocation4] sm:$0xff] %v413
          %v415 = vld [vmem:[#allocation5] sm:$0xff]
          %v416 = vsel %vm328, %v367, %v415
          %417 = vst [vmem:[#allocation5] sm:$0xff] %v416
          %v418 = vld [vmem:[#allocation6] sm:$0xff]
          %v419 = vsel %vm328, %v380, %v418
          %420 = vst [vmem:[#allocation6] sm:$0xff] %v419
          %v421 = vld [vmem:[#allocation7] sm:$0xff]
          %v422 = vsel %vm328, %v393, %v421
          %423 = vst [vmem:[#allocation7] sm:$0xff] %v422
          %v424 = vld [vmem:[#allocation8] sm:$0xff]
          %v425 = vsel %vm328, %v406, %v424
          %426 = vst [vmem:[#allocation8] sm:$0xff] %v425
          %s427 = sadd.s32 %s277, 1
          %s428 = sld [smem:[#allocation13 + %s427]]
          %s429 = smul.u32 %s428, 27
          %s430 = sadd.s32 %s266, %s429
          %s431 = sld [smem:[#allocation9 + %s430]]
          %s432 = sadd.s32 %s430, 1
          %s433 = sld [smem:[#allocation9 + %s432]]
          %s434 = sadd.s32 %s430, 2
          %s435 = sld [smem:[#allocation9 + %s434]]
          %s436 = sadd.s32 %s430, 3
          %s437 = sld [smem:[#allocation9 + %s436]]
          %s438 = sadd.s32 %s430, 4
          %s439 = sld [smem:[#allocation9 + %s438]]
          %s440 = sadd.s32 %s430, 5
          %s441 = sld [smem:[#allocation9 + %s440]]
          %s442 = sadd.s32 %s430, 6
          %s443 = sld [smem:[#allocation9 + %s442]]
          %s444 = sadd.s32 %s430, 7
          %s445 = sld [smem:[#allocation9 + %s444]]
          %s446 = sadd.s32 %s430, 8
          %s447 = sld [smem:[#allocation9 + %s446]]
          %v448 = vstv %s431
          %v449 = vmul.f32 %v448, %v264
          %v450 = vstv %s433
          %v451 = vmul.f32 %v450, %v262
          %v452 = vadd.f32 %v449, %v451
          %v453 = vstv %s435
          %v454 = vadd.f32 %v452, %v453
          %v455 = vstv %s437
          %v456 = vmul.f32 %v455, %v264
          %v457 = vstv %s439
          %v458 = vmul.f32 %v457, %v262
          %v459 = vadd.f32 %v456, %v458
          %v460 = vstv %s441
          %v461 = vadd.f32 %v459, %v460
          %v462 = vsub.f32 1.0, %v454
          %v463 = vsub.f32 %v462, %v461
          %v464 = vstv %s445
          %v465 = vmul.f32 %v454, %v464
          %v466 = vstv %s443
          %v467 = vadd.f32 %v466, %v465
          %v468 = vstv %s447
          %v469 = vmul.f32 %v461, %v468
          %v470 = vadd.f32 %v467, %v469
          %v471 = vld [vmem:[#allocation2] sm:$0xff]
          %v472 = vmin.f32 %v454, %v461
          %v473 = vmin.f32 %v463, %v472
          %vm474 = vcmp.ge.f32.partialorder %v473, 0.0
          %vm475 = vcmp.gt.f32.partialorder %v470, 1e-05
          %vm476 = vmand %vm474, %vm475
          %vm477 = vcmp.lt.f32.partialorder %v470, %v471
          %vm478 = vmand %vm476, %vm477
          %s479 = sadd.s32 %s430, 9
          %s480 = sld [smem:[#allocation9 + %s479]]
          %s481 = sadd.s32 %s430, 12
          %s482 = sld [smem:[#allocation9 + %s481]]
          %v483 = vstv %s482
          %v484 = vmul.f32 %v454, %v483
          %v485 = vstv %s480
          %v486 = vadd.f32 %v485, %v484
          %s487 = sadd.s32 %s430, 15
          %s488 = sld [smem:[#allocation9 + %s487]]
          %v489 = vstv %s488
          %v490 = vmul.f32 %v461, %v489
          %v491 = vadd.f32 %v486, %v490
          %s492 = sadd.s32 %s430, 10
          %s493 = sld [smem:[#allocation9 + %s492]]
          %s494 = sadd.s32 %s430, 13
          %s495 = sld [smem:[#allocation9 + %s494]]
          %v496 = vstv %s495
          %v497 = vmul.f32 %v454, %v496
          %v498 = vstv %s493
          %v499 = vadd.f32 %v498, %v497
          %s500 = sadd.s32 %s430, 16
          %s501 = sld [smem:[#allocation9 + %s500]]
          %v502 = vstv %s501
          %v503 = vmul.f32 %v461, %v502
          %v504 = vadd.f32 %v499, %v503
          %s505 = sadd.s32 %s430, 11
          %s506 = sld [smem:[#allocation9 + %s505]]
          %s507 = sadd.s32 %s430, 14
          %s508 = sld [smem:[#allocation9 + %s507]]
          %v509 = vstv %s508
          %v510 = vmul.f32 %v454, %v509
          %v511 = vstv %s506
          %v512 = vadd.f32 %v511, %v510
          %s513 = sadd.s32 %s430, 17
          %s514 = sld [smem:[#allocation9 + %s513]]
          %v515 = vstv %s514
          %v516 = vmul.f32 %v461, %v515
          %v517 = vadd.f32 %v512, %v516
          %s518 = sadd.s32 %s430, 18
          %s519 = sld [smem:[#allocation9 + %s518]]
          %s520 = sadd.s32 %s430, 21
          %s521 = sld [smem:[#allocation9 + %s520]]
          %v522 = vstv %s521
          %v523 = vmul.f32 %v454, %v522
          %v524 = vstv %s519
          %v525 = vadd.f32 %v524, %v523
          %s526 = sadd.s32 %s430, 24
          %s527 = sld [smem:[#allocation9 + %s526]]
          %v528 = vstv %s527
          %v529 = vmul.f32 %v461, %v528
          %v530 = vadd.f32 %v525, %v529
          %s531 = sadd.s32 %s430, 19
          %s532 = sld [smem:[#allocation9 + %s531]]
          %s533 = sadd.s32 %s430, 22
          %s534 = sld [smem:[#allocation9 + %s533]]
          %v535 = vstv %s534
          %v536 = vmul.f32 %v454, %v535
          %v537 = vstv %s532
          %v538 = vadd.f32 %v537, %v536
          %s539 = sadd.s32 %s430, 25
          %s540 = sld [smem:[#allocation9 + %s539]]
          %v541 = vstv %s540
          %v542 = vmul.f32 %v461, %v541
          %v543 = vadd.f32 %v538, %v542
          %s544 = sadd.s32 %s430, 20
          %s545 = sld [smem:[#allocation9 + %s544]]
          %s546 = sadd.s32 %s430, 23
          %s547 = sld [smem:[#allocation9 + %s546]]
          %v548 = vstv %s547
          %v549 = vmul.f32 %v454, %v548
          %v550 = vstv %s545
          %v551 = vadd.f32 %v550, %v549
          %s552 = sadd.s32 %s430, 26
          %s553 = sld [smem:[#allocation9 + %s552]]
          %v554 = vstv %s553
          %v555 = vmul.f32 %v461, %v554
          %v556 = vadd.f32 %v551, %v555
          %v557 = vsel %vm478, %v470, %v471
          %558 = vst [vmem:[#allocation2] sm:$0xff] %v557
          %v559 = vld [vmem:[#allocation3] sm:$0xff]
          %v560 = vsel %vm478, %v491, %v559
          %561 = vst [vmem:[#allocation3] sm:$0xff] %v560
          %v562 = vld [vmem:[#allocation4] sm:$0xff]
          %v563 = vsel %vm478, %v504, %v562
          %564 = vst [vmem:[#allocation4] sm:$0xff] %v563
          %v565 = vld [vmem:[#allocation5] sm:$0xff]
          %v566 = vsel %vm478, %v517, %v565
          %567 = vst [vmem:[#allocation5] sm:$0xff] %v566
          %v568 = vld [vmem:[#allocation6] sm:$0xff]
          %v569 = vsel %vm478, %v530, %v568
          %570 = vst [vmem:[#allocation6] sm:$0xff] %v569
          %v571 = vld [vmem:[#allocation7] sm:$0xff]
          %v572 = vsel %vm478, %v543, %v571
          %573 = vst [vmem:[#allocation7] sm:$0xff] %v572
          %v574 = vld [vmem:[#allocation8] sm:$0xff]
          %v575 = vsel %vm478, %v556, %v574
          %576 = vst [vmem:[#allocation8] sm:$0xff] %v575
        $region57: #{tpu_custom_call.1} parent=35 // loop_footer
          %s273 = sadd.s32 %s271, 1
        $region58: #{tpu_custom_call.1} parent=35 // loop_footer_branch
          %270 = sbr.rel target = $region54
        $region59: #{tpu_custom_call.1} parent=35 // loop_exit
          _
        %v577 = vld [vmem:[#allocation2] sm:$0xff]
        %vm578 = vcmp.lt.f32.partialorder %v577, 1e+09
        %v579 = vld [vmem:[#allocation6] sm:$0xff]
        %v580 = vld [vmem:[#allocation7] sm:$0xff]
        %v581 = vld [vmem:[#allocation8] sm:$0xff]
        %v582 = vld [vmem:[#allocation3] sm:$0xff]
        %v583 = vld [vmem:[#allocation4] sm:$0xff]
        %v584 = vld [vmem:[#allocation5] sm:$0xff]
        %v585 = vmul.f32 %v579, %v579
        %v586 = vmul.f32 %v580, %v580
        %v587 = vadd.f32 %v585, %v586
        %v588 = vmul.f32 %v581, %v581
        %v589 = vadd.f32 %v587, %v588
        %v590 = vadd.f32 %v589, 1e-12
        %v591 = vrsqrt.pop %v590
        %v592 = vmul.f32 %v579, %v591
        %v593 = vmul.f32 %v580, %v591
        %v594 = vmul.f32 %v581, %v591
        %s595 = smul.u32 %s25, 6
        %s596 = sld [smem:[#allocation16 + %s595]]
        %s597 = sadd.s32 %s595, 1
        %s598 = sld [smem:[#allocation16 + %s597]]
        %s599 = sadd.s32 %s595, 2
        %s600 = sld [smem:[#allocation16 + %s599]]
        %s601 = sadd.s32 %s595, 3
        %s602 = sld [smem:[#allocation16 + %s601]]
        %s603 = sadd.s32 %s595, 4
        %s604 = sld [smem:[#allocation16 + %s603]]
        %s605 = sadd.s32 %s595, 5
        %s606 = sld [smem:[#allocation16 + %s605]]
        %v607 = vstv %s602
        %v608 = vsub.f32 %v607, %v582
        %v609 = vstv %s604
        %v610 = vsub.f32 %v609, %v583
        %v611 = vstv %s606
        %v612 = vsub.f32 %v611, %v584
        %v613 = vmul.f32 %v608, %v608
        %v614 = vmul.f32 %v610, %v610
        %v615 = vadd.f32 %v613, %v614
        %v616 = vmul.f32 %v612, %v612
        %v617 = vadd.f32 %v615, %v616
        %v618 = vadd.f32 %v617, 1e-12
        %v619 = vrsqrt.pop %v618
        %v620 = vmul.f32 %v608, %v619
        %v621 = vmul.f32 %v610, %v619
        %v622 = vmul.f32 %v612, %v619
        %v623 = vstv %s596
        %v624 = vsub.f32 %v623, %v582
        %v625 = vstv %s598
        %v626 = vsub.f32 %v625, %v583
        %v627 = vstv %s600
        %v628 = vsub.f32 %v627, %v584
        %v629 = vmul.f32 %v624, %v624
        %v630 = vmul.f32 %v626, %v626
        %v631 = vadd.f32 %v629, %v630
        %v632 = vmul.f32 %v628, %v628
        %v633 = vadd.f32 %v631, %v632
        %v634 = vadd.f32 %v633, 1e-12
        %v635 = vrsqrt.pop %v634
        %v636 = vmul.f32 %v624, %v635
        %v637 = vmul.f32 %v626, %v635
        %v638 = vmul.f32 %v628, %v635
        %v639 = vmul.f32 %v592, %v620
        %v640 = vmul.f32 %v593, %v621
        %v641 = vadd.f32 %v639, %v640
        %v642 = vmul.f32 %v594, %v622
        %v643 = vadd.f32 %v641, %v642
        %v644 = vmul.f32 %v643, 2.0
        %v645 = vmul.f32 %v644, %v592
        %v646 = vsub.f32 %v645, %v620
        %v647 = vmul.f32 %v644, %v593
        %v648 = vsub.f32 %v647, %v621
        %v649 = vmul.f32 %v644, %v594
        %v650 = vsub.f32 %v649, %v622
        %v651 = vmul.f32 %v646, %v636
        %v652 = vmul.f32 %v648, %v637
        %v653 = vadd.f32 %v651, %v652
        %v654 = vmul.f32 %v650, %v638
        %v655 = vadd.f32 %v653, %v654
        %v656 = vmax.f32 %v655, 0.0
        %v657 = vmul.f32 %v656, %v656
        %v658 = vmul.f32 %v657, %v657
        %v659 = vmul.f32 %v658, %v658
        %v660 = vmul.f32 %v659, %v659
        %v661 = vmul.f32 %v660, %v660
        %v662 = vmul.f32 %v661, %v661
        %v663 = vmax.f32 %v643, 0.0
        %v664 = vmul.f32 %v663, 0.3
        %v665 = vadd.f32 %v664, 0.5
        %v666 = vmul.f32 %v662, 0.2
        %v667 = vadd.f32 %v665, %v666
        %v668 = vmul.f32 %v667, 255.0
        %v669 = vsel %vm578, %v668, 0.0
        %670 = vst [vmem:[%s239] sm:$0xff] %v669
        %s671 = sand.u32 %s127, 1
        %s672 = scalar_lea.sflag [#allocation10], %s671
        %s673 = sand.u32 %s127, 1
        %s674 = smul.addr %s673, 8
        %s675 = scalar_lea.vmem [#allocation17], %s674
        // Predicated region
        $region60: #{tpu_custom_call.1} parent=35 // pred_check
          %p676 = pneg %p137
        $region61: #{tpu_custom_call.1} parent=35 // pred_check_branch
          %678 = sbr.rel (%p676) target = $region63
        $region62: #{tpu_custom_call.1} parent=35 // pred_region
          %s680 = ssub.s32 128, 128
          %681 = vsyncadd %s672, %s680
          %s682 = sadd.s32 %s26, %s25
          %s683 = smul.addr %s682, 128
          %s684 = scalar_lea.hbm %s4, %s683
          %s686 = sshll.u32 %s675, 4
          %s687 = int_to_ptr.vmem [resolvable:$true] %s686
          %689 = dma.vmem_to_hbm [thread:$0]  %s687, 128, %s684, %s672
        $region63: #{tpu_custom_call.1} parent=35 // pred_fallthru
          _
      $region36: #{tpu_custom_call.1} parent=5 // pred_fallthru
        _
      %p690 = scmp.le.s32.totalorder 2, %s16
      // Predicated region
      $region64: #{tpu_custom_call.1} parent=5 // pred_check
        %p691 = pneg %p690
      $region65: #{tpu_custom_call.1} parent=5 // pred_check_branch
        %693 = sbr.rel (%p691) target = $region67
      $region66: #{tpu_custom_call.1} parent=5 // pred_region
        %s694 = ssub.s32 %s16, 2
        // Predicated region
        $region68: #{tpu_custom_call.1} parent=66 // pred_check
          %p695 = pneg %p143
        $region69: #{tpu_custom_call.1} parent=66 // pred_check_branch
          %697 = sbr.rel (%p695) target = $region71
        $region70: #{tpu_custom_call.1} parent=66 // pred_region
          %s698 = sand.u32 %s128, 1
          %s699 = scalar_lea.sflag [#allocation10], %s698
          %s700 = sand.u32 %s128, 1
          %s701 = smul.addr %s700, 8
          %s702 = scalar_lea.vmem [#allocation17], %s701
          %703 = dma.done %s699, 128
        $region71: #{tpu_custom_call.1} parent=66 // pred_fallthru
          _
      $region67: #{tpu_custom_call.1} parent=5 // pred_fallthru
        _
    $region6: #{tpu_custom_call.1} parent=1 // loop_footer
      %s20 = sadd.s32 1, %s16
    $region7: #{tpu_custom_call.1} parent=1 // loop_footer_branch
      %15 = sbr.rel target = $region3
    $region8: #{tpu_custom_call.1} parent=1 // loop_exit
      _
    %704 = vsyncpa [#allocation10], 1
    %s705 = scalar_lea.sflag [#allocation10], 1
    %706 = vsyncpa %s705, 1
    %707 = vsyncpa [#allocation11], 1
    %s708 = scalar_lea.sflag [#allocation11], 1
    %709 = vsyncpa %s708, 1
    %710 = vsyncpa [#allocation12], 1
    %s711 = scalar_lea.sflag [#allocation12], 1
    %712 = vsyncpa %s711, 1
    %713 = vsyncpa [#allocation15], 1

</llo_original>
